<compile_context>
chip_gen: v7x
topology: tpu7x:2x2x1
jax: 0.10.0
libtpu: 0.0.40
codegen_flags: <defaults>
</compile_context>

<pallas_src>
import functools
import math

import jax
import jax.numpy as jnp
from jax.experimental import pallas as pl
from jax.experimental.pallas import tpu as pltpu

EPS = 1e-6


def cross_attention_kernel(
    x_ref,      # (1, tS, H)  f32   input tile
    ctx_ref,    # (1, C,  H)  bf16  full context for this batch element
    wq_ref,     # (H, H)      bf16  nn.Linear (out,in) layout, pre-scaled by 1/sqrt(hd)
    wk_ref,     # (H, H)      bf16
    wv_ref,     # (H, H)      bf16
    wo_ref,     # (H, H)      bf16
    bq_ref,     # (1, H)      f32   pre-scaled by 1/sqrt(hd)
    bk_ref,     # (1, H)      f32
    bv_ref,     # (1, H)      f32
    bo_ref,     # (1, H)      f32
    g_ref,      # (1, H)      f32   RMSNorm gain
    o_ref,      # (1, tS, H)  output tile
    q_sc,       # (tS, H)     bf16  full-width Q for this tile
    k_sc,       # (C, H)      bf16  cached K (all heads) for this batch element
    v_sc,       # (C, H)      bf16  cached V (all heads) for this batch element
    oh_sc,      # (tS, H)     bf16  per-head attention outputs, concatenated
    *, num_heads, head_dim,
):
    s_idx = pl.program_id(1)
    hidden = num_heads * head_dim

    # 2-D MXU contraction patterns (no transposes anywhere).
    dn_nt = (((1,), (1,)), ((), ()))   # (M,K) x (N,K) -> (M,N)
    dn_nn = (((1,), (0,)), ((), ()))   # (M,K) x (K,N) -> (M,N)

    # ---- once per batch element: full-width K/V projections, cached in VMEM ----
    @pl.when(s_idx == 0)
    def _kv():
        ctx = ctx_ref[0]                                              # (C, H) bf16
        k = jax.lax.dot_general(ctx, wk_ref[...], dn_nt,
                                preferred_element_type=jnp.float32) + bk_ref[...]
        v = jax.lax.dot_general(ctx, wv_ref[...], dn_nt,
                                preferred_element_type=jnp.float32) + bv_ref[...]
        k_sc[...] = k.astype(jnp.bfloat16)
        v_sc[...] = v.astype(jnp.bfloat16)

    # ---- RMSNorm of the x tile (f32, double-eps quirk of the PyTorch module) ----
    x = x_ref[0]                                                      # (tS, H) f32
    x1 = x + EPS                                                      # numerator gets one eps
    nrm = jnp.sqrt(jnp.sum((x1 + EPS) ** 2, axis=-1, keepdims=True))  # denom gets a second eps
    nrm = nrm * (hidden ** 0.5) + EPS
    xn = (x1 / nrm) * g_ref[...]

    # ---- full-width Q projection (softmax scale pre-folded into Wq / bq) --------
    q = jax.lax.dot_general(xn.astype(jnp.bfloat16), wq_ref[...], dn_nt,
                            preferred_element_type=jnp.float32) + bq_ref[...]
    q_sc[...] = q.astype(jnp.bfloat16)

    # ---- per-head attention: static unroll => static lane slices only -----------
    for h in range(num_heads):
        lo = h * head_dim
        hi = lo + head_dim
        q_h = q_sc[:, lo:hi]                                          # (tS, hd) bf16
        k_h = k_sc[:, lo:hi]                                          # (C,  hd) bf16
        v_h = v_sc[:, lo:hi]                                          # (C,  hd) bf16

        s = jax.lax.dot_general(q_h, k_h, dn_nt,
                                preferred_element_type=jnp.float32)   # (tS, C) f32
        m = jnp.max(s, axis=-1, keepdims=True)
        p = jnp.exp(s - m)
        l = jnp.sum(p, axis=-1, keepdims=True)                        # (tS, 1)
        o_h = jax.lax.dot_general(p.astype(jnp.bfloat16), v_h, dn_nn,
                                  preferred_element_type=jnp.float32)  # (tS, hd)
        o_h = o_h * pl.reciprocal(l, approx=True)                     # normalize after PV (EUP)
        oh_sc[:, lo:hi] = o_h.astype(jnp.bfloat16)

    # ---- single full-width output projection ------------------------------------
    out = jax.lax.dot_general(oh_sc[...], wo_ref[...], dn_nt,
                              preferred_element_type=jnp.float32) + bo_ref[...]
    o_ref[0] = out.astype(o_ref.dtype)


def _vmem_limit_bytes():
    """Generation-aware scoped-VMEM limit (3/4 of physical, capped at 100 MiB)."""
    try:
        cap = pltpu.get_tpu_info().vmem_capacity_bytes
    except Exception:
        cap = 64 * 1024 * 1024
    return int(min(cap * 3 // 4, 100 * 1024 * 1024))


def cross_attention_pallas(x, context, params, num_heads, *, seq_tile=512):
    B, S, H = x.shape
    C = context.shape[1]
    head_dim = H // num_heads
    assert num_heads * head_dim == H

    tS = min(S, seq_tile)
    n_s = pl.cdiv(S, tS)

    f32, bf16 = jnp.float32, jnp.bfloat16
    inv_sqrt_d = 1.0 / math.sqrt(head_dim)

    # Context in bf16: halves HBM->VMEM traffic and VMEM residency.
    ctx_bf16 = context.astype(bf16)

    # Weights stay in nn.Linear (out, in) layout (contracted on dim 1 in-kernel,
    # no transpose).  Softmax scale folded into Wq / bq at parameter-load time.
    wq = (params["wq"] * inv_sqrt_d).astype(bf16)
    wk = params["wk"].astype(bf16)
    wv = params["wv"].astype(bf16)
    wo = params["wo"].astype(bf16)

    bq = (params["bq"] * inv_sqrt_d).reshape(1, H).astype(f32)
    bk = params["bk"].reshape(1, H).astype(f32)
    bv = params["bv"].reshape(1, H).astype(f32)
    bo = params["bo"].reshape(1, H).astype(f32)
    g = params["g"].reshape(1, H).astype(f32)

    kernel = functools.partial(cross_attention_kernel,
                               num_heads=num_heads, head_dim=head_dim)

    flops = 2 * B * (S * H * H          # q projection
                     + 2 * C * H * H    # k, v projections
                     + S * H * H        # o projection
                     + 2 * S * C * H)   # QK^T + PV
    bytes_accessed = (4 * 2 * B * S * H        # x in + out (f32)
                      + 2 * B * C * H          # context (bf16)
                      + 2 * 4 * H * H          # four bf16 weight matrices (resident, once)
                      + 4 * 5 * H)             # biases + g
    cost = pl.CostEstimate(flops=flops,
                           transcendentals=B * num_heads * S * C,
                           bytes_accessed=bytes_accessed)

    const2 = lambda b, s: (0, 0)   # resident operands: DMA'd once, never re-fetched

    grid_spec = pltpu.PrefetchScalarGridSpec(
        num_scalar_prefetch=0,
        grid=(B, n_s),
        in_specs=[
            pl.BlockSpec((1, tS, H), lambda b, s: (b, s, 0)),   # x
            pl.BlockSpec((1, C, H), lambda b, s: (b, 0, 0)),    # context (bf16)
            pl.BlockSpec((H, H), const2),                       # Wq (pre-scaled)
            pl.BlockSpec((H, H), const2),                       # Wk
            pl.BlockSpec((H, H), const2),                       # Wv
            pl.BlockSpec((H, H), const2),                       # Wo
            pl.BlockSpec((1, H), const2),                       # bq (pre-scaled)
            pl.BlockSpec((1, H), const2),                       # bk
            pl.BlockSpec((1, H), const2),                       # bv
            pl.BlockSpec((1, H), const2),                       # bo
            pl.BlockSpec((1, H), const2),                       # g
        ],
        out_specs=pl.BlockSpec((1, tS, H), lambda b, s: (b, s, 0)),
        scratch_shapes=[
            pltpu.VMEM((tS, H), bf16),   # Q (all heads) for this tile
            pltpu.VMEM((C, H), bf16),    # K cache (all heads)
            pltpu.VMEM((C, H), bf16),    # V cache (all heads)
            pltpu.VMEM((tS, H), bf16),   # per-head outputs, concatenated
        ],
    )

    return pl.pallas_call(
        kernel,
        out_shape=jax.ShapeDtypeStruct((B, S, H), x.dtype),
        grid_spec=grid_spec,
        compiler_params=pltpu.CompilerParams(
            dimension_semantics=("parallel", "arbitrary"),
            vmem_limit_bytes=_vmem_limit_bytes(),
        ),
        cost_estimate=cost,
    )(x, ctx_bf16, wq, wk, wv, wo, bq, bk, bv, bo, g)


def cross_attention_reference(x, context, p, num_heads):
    """Pure-JAX f32 reference matching the PyTorch forward (eval mode, no mask)."""
    B, S, H = x.shape
    C = context.shape[1]
    hd = H // num_heads
    x1 = x + EPS
    norm = jnp.linalg.norm(x1 + EPS, axis=-1, keepdims=True) * (H ** 0.5) + EPS
    xn = x1 / norm * p["g"]
    q = xn @ p["wq"].T + p["bq"]
    k = context @ p["wk"].T + p["bk"]
    v = context @ p["wv"].T + p["bv"]
    q = q.reshape(B, S, num_heads, hd).transpose(0, 2, 1, 3)
    k = k.reshape(B, C, num_heads, hd).transpose(0, 2, 1, 3)
    v = v.reshape(B, C, num_heads, hd).transpose(0, 2, 1, 3)
    s = jnp.einsum("bhqd,bhkd->bhqk", q, k) / math.sqrt(hd)
    a = jax.nn.softmax(s, axis=-1)
    o = jnp.einsum("bhqk,bhkd->bhqd", a, v)
    o = o.transpose(0, 2, 1, 3).reshape(B, S, H)
    return o @ p["wo"].T + p["bo"]


if __name__ == "__main__":
    # Small config: batch=2, seq=8, context_len=16, hidden=32, heads=4 (head_dim=8)
    B, S, C, H, NH = 2, 8, 16, 32, 4

    key = jax.random.PRNGKey(0)
    keys = jax.random.split(key, 12)
    x = jax.random.normal(keys[0], (B, S, H), dtype=jnp.float32)
    context = jax.random.normal(keys[1], (B, C, H), dtype=jnp.float32)

    params = {
        "wq": 0.02 * jax.random.normal(keys[2], (H, H), dtype=jnp.float32),
        "bq": 0.01 * jax.random.normal(keys[3], (H,), dtype=jnp.float32),
        "wk": 0.02 * jax.random.normal(keys[4], (H, H), dtype=jnp.float32),
        "bk": 0.01 * jax.random.normal(keys[5], (H,), dtype=jnp.float32),
        "wv": 0.02 * jax.random.normal(keys[6], (H, H), dtype=jnp.float32),
        "bv": 0.01 * jax.random.normal(keys[7], (H,), dtype=jnp.float32),
        "wo": 0.02 * jax.random.normal(keys[8], (H, H), dtype=jnp.float32),
        "bo": 0.01 * jax.random.normal(keys[9], (H,), dtype=jnp.float32),
        # RMSNorm.g initialized to ones then += eps (matches PyTorch __init__)
        "g": jnp.ones((H,), dtype=jnp.float32) + EPS,
    }

    out = cross_attention_pallas(x, context, params, NH)
    out = jax.block_until_ready(out)

    ref = cross_attention_reference(x, context, params, NH)
    assert out.shape == (B, S, H)
    # bf16 matmul operands + approx reciprocal loosen the tolerance vs f32 ref.
    err = jnp.max(jnp.abs(out - ref))
    assert jnp.allclose(out, ref, atol=3e-3, rtol=3e-2), f"max abs err = {err}"

    print("KERNEL_OK")
</pallas_src>

<mosaic_0001>
module attributes {stable_mosaic.version = 11 : i64} {
  func.func @cross_attention_kernel(%arg0: i32, %arg1: i32, %arg2: memref<1x8x32xf32, #tpu.memory_space<vmem>>, %arg3: memref<1x16x32xbf16, #tpu.memory_space<vmem>>, %arg4: memref<32x32xbf16, #tpu.memory_space<vmem>>, %arg5: memref<32x32xbf16, #tpu.memory_space<vmem>>, %arg6: memref<32x32xbf16, #tpu.memory_space<vmem>>, %arg7: memref<32x32xbf16, #tpu.memory_space<vmem>>, %arg8: memref<1x32xf32, #tpu.memory_space<vmem>>, %arg9: memref<1x32xf32, #tpu.memory_space<vmem>>, %arg10: memref<1x32xf32, #tpu.memory_space<vmem>>, %arg11: memref<1x32xf32, #tpu.memory_space<vmem>>, %arg12: memref<1x32xf32, #tpu.memory_space<vmem>>, %arg13: memref<1x8x32xf32, #tpu.memory_space<vmem>>, %arg14: memref<8x32xbf16, #tpu.memory_space<vmem>>, %arg15: memref<16x32xbf16, #tpu.memory_space<vmem>>, %arg16: memref<16x32xbf16, #tpu.memory_space<vmem>>, %arg17: memref<8x32xbf16, #tpu.memory_space<vmem>>) attributes {dimension_semantics = [#tpu.dimension_semantics<parallel>, #tpu.dimension_semantics<arbitrary>], iteration_bounds = array<i64: 2, 1>, scalar_prefetch = 0 : i64, scratch_operands = 4 : i64, tpu.core_type = #tpu.core_type<tc>, window_params = [{transform_indices = @transform_0, window_bounds = array<i64: 1, 8, 32>}, {transform_indices = @transform_1, window_bounds = array<i64: 1, 16, 32>}, {pipeline_mode = #tpu.pipeline_mode<synchronous>, transform_indices = @transform_2, window_bounds = array<i64: 32, 32>}, {pipeline_mode = #tpu.pipeline_mode<synchronous>, transform_indices = @transform_3, window_bounds = array<i64: 32, 32>}, {pipeline_mode = #tpu.pipeline_mode<synchronous>, transform_indices = @transform_4, window_bounds = array<i64: 32, 32>}, {pipeline_mode = #tpu.pipeline_mode<synchronous>, transform_indices = @transform_5, window_bounds = array<i64: 32, 32>}, {pipeline_mode = #tpu.pipeline_mode<synchronous>, transform_indices = @transform_6, window_bounds = array<i64: 1, 32>}, {pipeline_mode = #tpu.pipeline_mode<synchronous>, transform_indices = @transform_7, window_bounds = array<i64: 1, 32>}, {pipeline_mode = #tpu.pipeline_mode<synchronous>, transform_indices = @transform_8, window_bounds = array<i64: 1, 32>}, {pipeline_mode = #tpu.pipeline_mode<synchronous>, transform_indices = @transform_9, window_bounds = array<i64: 1, 32>}, {pipeline_mode = #tpu.pipeline_mode<synchronous>, transform_indices = @transform_10, window_bounds = array<i64: 1, 32>}, {transform_indices = @transform_11, window_bounds = array<i64: 1, 8, 32>}]} {
    %c0_i32 = arith.constant 0 : i32
    %0 = arith.cmpi eq, %arg1, %c0_i32 : i32
    %1 = arith.extui %0 : i1 to i32
    %c0_i32_0 = arith.constant 0 : i32
    %2 = arith.cmpi ne, %1, %c0_i32_0 : i32
    scf.if %2 {
      %c0_71 = arith.constant 0 : index
      %c0_72 = arith.constant 0 : index
      %c0_73 = arith.constant 0 : index
      %111 = vector.load %arg3[%c0_71, %c0_72, %c0_73] : memref<1x16x32xbf16, #tpu.memory_space<vmem>>, vector<1x16x32xbf16>
      %112 = vector.shape_cast %111 : vector<1x16x32xbf16> to vector<16x32xbf16>
      %c0_74 = arith.constant 0 : index
      %c0_75 = arith.constant 0 : index
      %113 = vector.load %arg5[%c0_74, %c0_75] : memref<32x32xbf16, #tpu.memory_space<vmem>>, vector<32x32xbf16>
      %cst_76 = arith.constant dense<0.000000e+00> : vector<16x32xf32>
      %114 = tpu.matmul %112, %113, %cst_76 {dimension_numbers = #tpu.dot_dimension_numbers<[1], [1], [0], [0], [0, 0, 1, 0], [], []>} : vector<16x32xbf16>, vector<32x32xbf16>, vector<16x32xf32> -> vector<16x32xf32>
      %c0_77 = arith.constant 0 : index
      %c0_78 = arith.constant 0 : index
      %115 = vector.load %arg9[%c0_77, %c0_78] : memref<1x32xf32, #tpu.memory_space<vmem>>, vector<1x32xf32>
      %116 = vector.broadcast %115 : vector<1x32xf32> to vector<16x32xf32>
      %117 = arith.addf %114, %116 : vector<16x32xf32>
      %c0_79 = arith.constant 0 : index
      %c0_80 = arith.constant 0 : index
      %118 = vector.load %arg6[%c0_79, %c0_80] : memref<32x32xbf16, #tpu.memory_space<vmem>>, vector<32x32xbf16>
      %cst_81 = arith.constant dense<0.000000e+00> : vector<16x32xf32>
      %119 = tpu.matmul %112, %118, %cst_81 {dimension_numbers = #tpu.dot_dimension_numbers<[1], [1], [0], [0], [0, 0, 1, 0], [], []>} : vector<16x32xbf16>, vector<32x32xbf16>, vector<16x32xf32> -> vector<16x32xf32>
      %c0_82 = arith.constant 0 : index
      %c0_83 = arith.constant 0 : index
      %120 = vector.load %arg10[%c0_82, %c0_83] : memref<1x32xf32, #tpu.memory_space<vmem>>, vector<1x32xf32>
      %121 = vector.broadcast %120 : vector<1x32xf32> to vector<16x32xf32>
      %122 = arith.addf %119, %121 : vector<16x32xf32>
      %123 = arith.truncf %117 : vector<16x32xf32> to vector<16x32xbf16>
      %c0_84 = arith.constant 0 : index
      %c0_85 = arith.constant 0 : index
      %124 = vector.load %arg15[%c0_84, %c0_85] : memref<16x32xbf16, #tpu.memory_space<vmem>>, vector<16x32xbf16>
      tpu.vector_store %arg15[%c0_84, %c0_85], %123 {strides = array<i32>} : memref<16x32xbf16, #tpu.memory_space<vmem>>, vector<16x32xbf16>,
      %125 = arith.truncf %122 : vector<16x32xf32> to vector<16x32xbf16>
      %c0_86 = arith.constant 0 : index
      %c0_87 = arith.constant 0 : index
      %126 = vector.load %arg16[%c0_86, %c0_87] : memref<16x32xbf16, #tpu.memory_space<vmem>>, vector<16x32xbf16>
      tpu.vector_store %arg16[%c0_86, %c0_87], %125 {strides = array<i32>} : memref<16x32xbf16, #tpu.memory_space<vmem>>, vector<16x32xbf16>,
    } else {
    }
    %c0 = arith.constant 0 : index
    %c0_1 = arith.constant 0 : index
    %c0_2 = arith.constant 0 : index
    %3 = vector.load %arg2[%c0, %c0_1, %c0_2] : memref<1x8x32xf32, #tpu.memory_space<vmem>>, vector<1x8x32xf32>
    %4 = vector.shape_cast %3 : vector<1x8x32xf32> to vector<8x32xf32>
    %cst = arith.constant 9.99999997E-7 : f32
    %5 = vector.broadcast %cst : f32 to vector<8x32xf32>
    %6 = arith.addf %4, %5 : vector<8x32xf32>
    %cst_3 = arith.constant 9.99999997E-7 : f32
    %7 = vector.broadcast %cst_3 : f32 to vector<8x32xf32>
    %8 = arith.addf %6, %7 : vector<8x32xf32>
    %9 = arith.mulf %8, %8 : vector<8x32xf32>
    %cst_4 = arith.constant dense<0.000000e+00> : vector<8xf32>
    %10 = vector.multi_reduction <add>, %9, %cst_4 [1] : vector<8x32xf32> to vector<8xf32>
    %11 = vector.shape_cast %10 : vector<8xf32> to vector<8x1xf32>
    %12 = math.sqrt %11 : vector<8x1xf32>
    %cst_5 = arith.constant 5.65685415 : f32
    %13 = vector.broadcast %cst_5 : f32 to vector<8x1xf32>
    %14 = arith.mulf %12, %13 : vector<8x1xf32>
    %cst_6 = arith.constant 9.99999997E-7 : f32
    %15 = vector.broadcast %cst_6 : f32 to vector<8x1xf32>
    %16 = arith.addf %14, %15 : vector<8x1xf32>
    %17 = vector.broadcast %16 : vector<8x1xf32> to vector<8x32xf32>
    %18 = arith.divf %6, %17 : vector<8x32xf32>
    %c0_7 = arith.constant 0 : index
    %c0_8 = arith.constant 0 : index
    %19 = vector.load %arg12[%c0_7, %c0_8] : memref<1x32xf32, #tpu.memory_space<vmem>>, vector<1x32xf32>
    %20 = vector.broadcast %19 : vector<1x32xf32> to vector<8x32xf32>
    %21 = arith.mulf %18, %20 : vector<8x32xf32>
    %22 = arith.truncf %21 : vector<8x32xf32> to vector<8x32xbf16>
    %c0_9 = arith.constant 0 : index
    %c0_10 = arith.constant 0 : index
    %23 = vector.load %arg4[%c0_9, %c0_10] : memref<32x32xbf16, #tpu.memory_space<vmem>>, vector<32x32xbf16>
    %cst_11 = arith.constant dense<0.000000e+00> : vector<8x32xf32>
    %24 = tpu.matmul %22, %23, %cst_11 {dimension_numbers = #tpu.dot_dimension_numbers<[1], [1], [0], [0], [0, 0, 1, 0], [], []>} : vector<8x32xbf16>, vector<32x32xbf16>, vector<8x32xf32> -> vector<8x32xf32>
    %c0_12 = arith.constant 0 : index
    %c0_13 = arith.constant 0 : index
    %25 = vector.load %arg8[%c0_12, %c0_13] : memref<1x32xf32, #tpu.memory_space<vmem>>, vector<1x32xf32>
    %26 = vector.broadcast %25 : vector<1x32xf32> to vector<8x32xf32>
    %27 = arith.addf %24, %26 : vector<8x32xf32>
    %28 = arith.truncf %27 : vector<8x32xf32> to vector<8x32xbf16>
    %c0_14 = arith.constant 0 : index
    %c0_15 = arith.constant 0 : index
    %29 = vector.load %arg14[%c0_14, %c0_15] : memref<8x32xbf16, #tpu.memory_space<vmem>>, vector<8x32xbf16>
    tpu.vector_store %arg14[%c0_14, %c0_15], %28 {strides = array<i32>} : memref<8x32xbf16, #tpu.memory_space<vmem>>, vector<8x32xbf16>,
    %c0_16 = arith.constant 0 : index
    %c0_17 = arith.constant 0 : index
    %30 = vector.load %arg14[%c0_16, %c0_17] : memref<8x32xbf16, #tpu.memory_space<vmem>>, vector<8x8xbf16>
    %c0_18 = arith.constant 0 : index
    %c0_19 = arith.constant 0 : index
    %31 = vector.load %arg15[%c0_18, %c0_19] : memref<16x32xbf16, #tpu.memory_space<vmem>>, vector<16x8xbf16>
    %c0_20 = arith.constant 0 : index
    %c0_21 = arith.constant 0 : index
    %32 = vector.load %arg16[%c0_20, %c0_21] : memref<16x32xbf16, #tpu.memory_space<vmem>>, vector<16x8xbf16>
    %cst_22 = arith.constant dense<0.000000e+00> : vector<8x16xf32>
    %33 = tpu.matmul %30, %31, %cst_22 {dimension_numbers = #tpu.dot_dimension_numbers<[1], [1], [0], [0], [0, 0, 1, 0], [], []>} : vector<8x8xbf16>, vector<16x8xbf16>, vector<8x16xf32> -> vector<8x16xf32>
    %cst_23 = arith.constant dense<0xFF800000> : vector<8xf32>
    %34 = vector.multi_reduction <maximumf>, %33, %cst_23 [1] : vector<8x16xf32> to vector<8xf32>
    %35 = vector.shape_cast %34 : vector<8xf32> to vector<8x1xf32>
    %36 = vector.broadcast %35 : vector<8x1xf32> to vector<8x16xf32>
    %37 = arith.subf %33, %36 : vector<8x16xf32>
    %38 = math.exp %37 : vector<8x16xf32>
    %cst_24 = arith.constant dense<0.000000e+00> : vector<8xf32>
    %39 = vector.multi_reduction <add>, %38, %cst_24 [1] : vector<8x16xf32> to vector<8xf32>
    %40 = vector.shape_cast %39 : vector<8xf32> to vector<8x1xf32>
    %41 = arith.truncf %38 : vector<8x16xf32> to vector<8x16xbf16>
    %cst_25 = arith.constant dense<0.000000e+00> : vector<8x8xf32>
    %42 = tpu.matmul %41, %32, %cst_25 {dimension_numbers = #tpu.dot_dimension_numbers<[1], [0], [0], [1], [0, 0, 1, 1], [], []>} : vector<8x16xbf16>, vector<16x8xbf16>, vector<8x8xf32> -> vector<8x8xf32>
    %43 = tpu.reciprocal %40 {approx = true} : vector<8x1xf32> -> vector<8x1xf32>
    %44 = vector.broadcast %43 : vector<8x1xf32> to vector<8x8xf32>
    %45 = arith.mulf %42, %44 : vector<8x8xf32>
    %46 = arith.truncf %45 : vector<8x8xf32> to vector<8x8xbf16>
    %c0_26 = arith.constant 0 : index
    %c0_27 = arith.constant 0 : index
    %47 = vector.load %arg17[%c0_26, %c0_27] : memref<8x32xbf16, #tpu.memory_space<vmem>>, vector<8x8xbf16>
    tpu.vector_store %arg17[%c0_26, %c0_27], %46 {strides = array<i32>} : memref<8x32xbf16, #tpu.memory_space<vmem>>, vector<8x8xbf16>,
    %c0_28 = arith.constant 0 : index
    %c8 = arith.constant 8 : index
    %48 = vector.load %arg14[%c0_28, %c8] : memref<8x32xbf16, #tpu.memory_space<vmem>>, vector<8x8xbf16>
    %c0_29 = arith.constant 0 : index
    %c8_30 = arith.constant 8 : index
    %49 = vector.load %arg15[%c0_29, %c8_30] : memref<16x32xbf16, #tpu.memory_space<vmem>>, vector<16x8xbf16>
    %c0_31 = arith.constant 0 : index
    %c8_32 = arith.constant 8 : index
    %50 = vector.load %arg16[%c0_31, %c8_32] : memref<16x32xbf16, #tpu.memory_space<vmem>>, vector<16x8xbf16>
    %cst_33 = arith.constant dense<0.000000e+00> : vector<8x16xf32>
    %51 = tpu.matmul %48, %49, %cst_33 {dimension_numbers = #tpu.dot_dimension_numbers<[1], [1], [0], [0], [0, 0, 1, 0], [], []>} : vector<8x8xbf16>, vector<16x8xbf16>, vector<8x16xf32> -> vector<8x16xf32>
    %cst_34 = arith.constant dense<0xFF800000> : vector<8xf32>
    %52 = vector.multi_reduction <maximumf>, %51, %cst_34 [1] : vector<8x16xf32> to vector<8xf32>
    %53 = vector.shape_cast %52 : vector<8xf32> to vector<8x1xf32>
    %54 = vector.broadcast %53 : vector<8x1xf32> to vector<8x16xf32>
    %55 = arith.subf %51, %54 : vector<8x16xf32>
    %56 = math.exp %55 : vector<8x16xf32>
    %cst_35 = arith.constant dense<0.000000e+00> : vector<8xf32>
    %57 = vector.multi_reduction <add>, %56, %cst_35 [1] : vector<8x16xf32> to vector<8xf32>
    %58 = vector.shape_cast %57 : vector<8xf32> to vector<8x1xf32>
    %59 = arith.truncf %56 : vector<8x16xf32> to vector<8x16xbf16>
    %cst_36 = arith.constant dense<0.000000e+00> : vector<8x8xf32>
    %60 = tpu.matmul %59, %50, %cst_36 {dimension_numbers = #tpu.dot_dimension_numbers<[1], [0], [0], [1], [0, 0, 1, 1], [], []>} : vector<8x16xbf16>, vector<16x8xbf16>, vector<8x8xf32> -> vector<8x8xf32>
    %61 = tpu.reciprocal %58 {approx = true} : vector<8x1xf32> -> vector<8x1xf32>
    %62 = vector.broadcast %61 : vector<8x1xf32> to vector<8x8xf32>
    %63 = arith.mulf %60, %62 : vector<8x8xf32>
    %64 = arith.truncf %63 : vector<8x8xf32> to vector<8x8xbf16>
    %c0_37 = arith.constant 0 : index
    %c8_38 = arith.constant 8 : index
    %65 = vector.load %arg17[%c0_37, %c8_38] : memref<8x32xbf16, #tpu.memory_space<vmem>>, vector<8x8xbf16>
    tpu.vector_store %arg17[%c0_37, %c8_38], %64 {strides = array<i32>} : memref<8x32xbf16, #tpu.memory_space<vmem>>, vector<8x8xbf16>,
    %c0_39 = arith.constant 0 : index
    %c16 = arith.constant 16 : index
    %66 = vector.load %arg14[%c0_39, %c16] : memref<8x32xbf16, #tpu.memory_space<vmem>>, vector<8x8xbf16>
    %c0_40 = arith.constant 0 : index
    %c16_41 = arith.constant 16 : index
    %67 = vector.load %arg15[%c0_40, %c16_41] : memref<16x32xbf16, #tpu.memory_space<vmem>>, vector<16x8xbf16>
    %c0_42 = arith.constant 0 : index
    %c16_43 = arith.constant 16 : index
    %68 = vector.load %arg16[%c0_42, %c16_43] : memref<16x32xbf16, #tpu.memory_space<vmem>>, vector<16x8xbf16>
    %cst_44 = arith.constant dense<0.000000e+00> : vector<8x16xf32>
    %69 = tpu.matmul %66, %67, %cst_44 {dimension_numbers = #tpu.dot_dimension_numbers<[1], [1], [0], [0], [0, 0, 1, 0], [], []>} : vector<8x8xbf16>, vector<16x8xbf16>, vector<8x16xf32> -> vector<8x16xf32>
    %cst_45 = arith.constant dense<0xFF800000> : vector<8xf32>
    %70 = vector.multi_reduction <maximumf>, %69, %cst_45 [1] : vector<8x16xf32> to vector<8xf32>
    %71 = vector.shape_cast %70 : vector<8xf32> to vector<8x1xf32>
    %72 = vector.broadcast %71 : vector<8x1xf32> to vector<8x16xf32>
    %73 = arith.subf %69, %72 : vector<8x16xf32>
    %74 = math.exp %73 : vector<8x16xf32>
    %cst_46 = arith.constant dense<0.000000e+00> : vector<8xf32>
    %75 = vector.multi_reduction <add>, %74, %cst_46 [1] : vector<8x16xf32> to vector<8xf32>
    %76 = vector.shape_cast %75 : vector<8xf32> to vector<8x1xf32>
    %77 = arith.truncf %74 : vector<8x16xf32> to vector<8x16xbf16>
    %cst_47 = arith.constant dense<0.000000e+00> : vector<8x8xf32>
    %78 = tpu.matmul %77, %68, %cst_47 {dimension_numbers = #tpu.dot_dimension_numbers<[1], [0], [0], [1], [0, 0, 1, 1], [], []>} : vector<8x16xbf16>, vector<16x8xbf16>, vector<8x8xf32> -> vector<8x8xf32>
    %79 = tpu.reciprocal %76 {approx = true} : vector<8x1xf32> -> vector<8x1xf32>
    %80 = vector.broadcast %79 : vector<8x1xf32> to vector<8x8xf32>
    %81 = arith.mulf %78, %80 : vector<8x8xf32>
    %82 = arith.truncf %81 : vector<8x8xf32> to vector<8x8xbf16>
    %c0_48 = arith.constant 0 : index
    %c16_49 = arith.constant 16 : index
    %83 = vector.load %arg17[%c0_48, %c16_49] : memref<8x32xbf16, #tpu.memory_space<vmem>>, vector<8x8xbf16>
    tpu.vector_store %arg17[%c0_48, %c16_49], %82 {strides = array<i32>} : memref<8x32xbf16, #tpu.memory_space<vmem>>, vector<8x8xbf16>,
    %c0_50 = arith.constant 0 : index
    %c24 = arith.constant 24 : index
    %84 = vector.load %arg14[%c0_50, %c24] : memref<8x32xbf16, #tpu.memory_space<vmem>>, vector<8x8xbf16>
    %c0_51 = arith.constant 0 : index
    %c24_52 = arith.constant 24 : index
    %85 = vector.load %arg15[%c0_51, %c24_52] : memref<16x32xbf16, #tpu.memory_space<vmem>>, vector<16x8xbf16>
    %c0_53 = arith.constant 0 : index
    %c24_54 = arith.constant 24 : index
    %86 = vector.load %arg16[%c0_53, %c24_54] : memref<16x32xbf16, #tpu.memory_space<vmem>>, vector<16x8xbf16>
    %cst_55 = arith.constant dense<0.000000e+00> : vector<8x16xf32>
    %87 = tpu.matmul %84, %85, %cst_55 {dimension_numbers = #tpu.dot_dimension_numbers<[1], [1], [0], [0], [0, 0, 1, 0], [], []>} : vector<8x8xbf16>, vector<16x8xbf16>, vector<8x16xf32> -> vector<8x16xf32>
    %cst_56 = arith.constant dense<0xFF800000> : vector<8xf32>
    %88 = vector.multi_reduction <maximumf>, %87, %cst_56 [1] : vector<8x16xf32> to vector<8xf32>
    %89 = vector.shape_cast %88 : vector<8xf32> to vector<8x1xf32>
    %90 = vector.broadcast %89 : vector<8x1xf32> to vector<8x16xf32>
    %91 = arith.subf %87, %90 : vector<8x16xf32>
    %92 = math.exp %91 : vector<8x16xf32>
    %cst_57 = arith.constant dense<0.000000e+00> : vector<8xf32>
    %93 = vector.multi_reduction <add>, %92, %cst_57 [1] : vector<8x16xf32> to vector<8xf32>
    %94 = vector.shape_cast %93 : vector<8xf32> to vector<8x1xf32>
    %95 = arith.truncf %92 : vector<8x16xf32> to vector<8x16xbf16>
    %cst_58 = arith.constant dense<0.000000e+00> : vector<8x8xf32>
    %96 = tpu.matmul %95, %86, %cst_58 {dimension_numbers = #tpu.dot_dimension_numbers<[1], [0], [0], [1], [0, 0, 1, 1], [], []>} : vector<8x16xbf16>, vector<16x8xbf16>, vector<8x8xf32> -> vector<8x8xf32>
    %97 = tpu.reciprocal %94 {approx = true} : vector<8x1xf32> -> vector<8x1xf32>
    %98 = vector.broadcast %97 : vector<8x1xf32> to vector<8x8xf32>
    %99 = arith.mulf %96, %98 : vector<8x8xf32>
    %100 = arith.truncf %99 : vector<8x8xf32> to vector<8x8xbf16>
    %c0_59 = arith.constant 0 : index
    %c24_60 = arith.constant 24 : index
    %101 = vector.load %arg17[%c0_59, %c24_60] : memref<8x32xbf16, #tpu.memory_space<vmem>>, vector<8x8xbf16>
    tpu.vector_store %arg17[%c0_59, %c24_60], %100 {strides = array<i32>} : memref<8x32xbf16, #tpu.memory_space<vmem>>, vector<8x8xbf16>,
    %c0_61 = arith.constant 0 : index
    %c0_62 = arith.constant 0 : index
    %102 = vector.load %arg17[%c0_61, %c0_62] : memref<8x32xbf16, #tpu.memory_space<vmem>>, vector<8x32xbf16>
    %c0_63 = arith.constant 0 : index
    %c0_64 = arith.constant 0 : index
    %103 = vector.load %arg7[%c0_63, %c0_64] : memref<32x32xbf16, #tpu.memory_space<vmem>>, vector<32x32xbf16>
    %cst_65 = arith.constant dense<0.000000e+00> : vector<8x32xf32>
    %104 = tpu.matmul %102, %103, %cst_65 {dimension_numbers = #tpu.dot_dimension_numbers<[1], [1], [0], [0], [0, 0, 1, 0], [], []>} : vector<8x32xbf16>, vector<32x32xbf16>, vector<8x32xf32> -> vector<8x32xf32>
    %c0_66 = arith.constant 0 : index
    %c0_67 = arith.constant 0 : index
    %105 = vector.load %arg11[%c0_66, %c0_67] : memref<1x32xf32, #tpu.memory_space<vmem>>, vector<1x32xf32>
    %106 = vector.broadcast %105 : vector<1x32xf32> to vector<8x32xf32>
    %107 = arith.addf %104, %106 : vector<8x32xf32>
    %c0_68 = arith.constant 0 : index
    %c0_69 = arith.constant 0 : index
    %c0_70 = arith.constant 0 : index
    %108 = vector.load %arg13[%c0_68, %c0_69, %c0_70] : memref<1x8x32xf32, #tpu.memory_space<vmem>>, vector<1x8x32xf32>
    %109 = vector.shape_cast %108 : vector<1x8x32xf32> to vector<8x32xf32>
    %110 = vector.shape_cast %107 : vector<8x32xf32> to vector<1x8x32xf32>
    tpu.vector_store %arg13[%c0_68, %c0_69, %c0_70], %110 {strides = array<i32>} : memref<1x8x32xf32, #tpu.memory_space<vmem>>, vector<1x8x32xf32>,
    return
  }
  func.func @transform_0(%arg0: i32, %arg1: i32) -> (i32, i32, i32) {
    %c0_i32 = arith.constant 0 : i32
    %c0_i32_0 = arith.constant 0 : i32
    return %arg0, %arg1, %c0_i32 : i32, i32, i32
  }
  func.func @transform_1(%arg0: i32, %arg1: i32) -> (i32, i32, i32) {
    %c0_i32 = arith.constant 0 : i32
    %c0_i32_0 = arith.constant 0 : i32
    %c0_i32_1 = arith.constant 0 : i32
    return %arg0, %c0_i32, %c0_i32_0 : i32, i32, i32
  }
  func.func @transform_2(%arg0: i32, %arg1: i32) -> (i32, i32) {
    %c0_i32 = arith.constant 0 : i32
    %c0_i32_0 = arith.constant 0 : i32
    %c0_i32_1 = arith.constant 0 : i32
    return %c0_i32, %c0_i32_0 : i32, i32
  }
  func.func @transform_3(%arg0: i32, %arg1: i32) -> (i32, i32) {
    %c0_i32 = arith.constant 0 : i32
    %c0_i32_0 = arith.constant 0 : i32
    %c0_i32_1 = arith.constant 0 : i32
    return %c0_i32, %c0_i32_0 : i32, i32
  }
  func.func @transform_4(%arg0: i32, %arg1: i32) -> (i32, i32) {
    %c0_i32 = arith.constant 0 : i32
    %c0_i32_0 = arith.constant 0 : i32
    %c0_i32_1 = arith.constant 0 : i32
    return %c0_i32, %c0_i32_0 : i32, i32
  }
  func.func @transform_5(%arg0: i32, %arg1: i32) -> (i32, i32) {
    %c0_i32 = arith.constant 0 : i32
    %c0_i32_0 = arith.constant 0 : i32
    %c0_i32_1 = arith.constant 0 : i32
    return %c0_i32, %c0_i32_0 : i32, i32
  }
  func.func @transform_6(%arg0: i32, %arg1: i32) -> (i32, i32) {
    %c0_i32 = arith.constant 0 : i32
    %c0_i32_0 = arith.constant 0 : i32
    %c0_i32_1 = arith.constant 0 : i32
    return %c0_i32, %c0_i32_0 : i32, i32
  }
  func.func @transform_7(%arg0: i32, %arg1: i32) -> (i32, i32) {
    %c0_i32 = arith.constant 0 : i32
    %c0_i32_0 = arith.constant 0 : i32
    %c0_i32_1 = arith.constant 0 : i32
    return %c0_i32, %c0_i32_0 : i32, i32
  }
  func.func @transform_8(%arg0: i32, %arg1: i32) -> (i32, i32) {
    %c0_i32 = arith.constant 0 : i32
    %c0_i32_0 = arith.constant 0 : i32
    %c0_i32_1 = arith.constant 0 : i32
    return %c0_i32, %c0_i32_0 : i32, i32
  }
  func.func @transform_9(%arg0: i32, %arg1: i32) -> (i32, i32) {
    %c0_i32 = arith.constant 0 : i32
    %c0_i32_0 = arith.constant 0 : i32
    %c0_i32_1 = arith.constant 0 : i32
    return %c0_i32, %c0_i32_0 : i32, i32
  }
  func.func @transform_10(%arg0: i32, %arg1: i32) -> (i32, i32) {
    %c0_i32 = arith.constant 0 : i32
    %c0_i32_0 = arith.constant 0 : i32
    %c0_i32_1 = arith.constant 0 : i32
    return %c0_i32, %c0_i32_0 : i32, i32
  }
  func.func @transform_11(%arg0: i32, %arg1: i32) -> (i32, i32, i32) {
    %c0_i32 = arith.constant 0 : i32
    %c0_i32_0 = arith.constant 0 : i32
    return %arg0, %arg1, %c0_i32 : i32, i32, i32
  }
}

</mosaic_0001>

<llo_original>
// kernel: tpu_custom_call.1
$region0: #{tpu_custom_call.1}
  #allocation0 [shape = 'u32[]', space=smem, size = 0x4, offset = 0x4, fixed_abs, tag = 'smem constant byte address 0x4 - core index']
  #allocation1 [shape = 'u32[144,128]{1,0:T(1,128)}', space=vmem, size = 0x12000, scoped, tag = 'internal scratch']
  #allocation2 [shape = 'bf16[8,32]{1,0:T(8,128)(2,1)}', space=vmem, size = 0x800, scoped, tag = 'scratch operand']
  #allocation3 [shape = 'bf16[16,32]{1,0:T(16,128)(2,1)}', space=vmem, size = 0x1000, scoped, tag = 'scratch operand']
  #allocation4 [shape = 'bf16[16,32]{1,0:T(16,128)(2,1)}', space=vmem, size = 0x1000, scoped, tag = 'scratch operand']
  #allocation5 [shape = 'bf16[8,32]{1,0:T(8,128)(2,1)}', space=vmem, size = 0x800, scoped, tag = 'scratch operand']
  %s0 = inlined_call_operand.hbm [shape: f32[2,8,32], index: 0, kind: input, shape index: {}]
  %s1 = inlined_call_operand.hbm [shape: bf16[2,16,32], index: 1, kind: input, shape index: {}]
  %s2 = inlined_call_operand.hbm [shape: bf16[32,32], index: 2, kind: input, shape index: {}]
  %s3 = inlined_call_operand.hbm [shape: bf16[32,32], index: 3, kind: input, shape index: {}]
  %s4 = inlined_call_operand.hbm [shape: bf16[32,32], index: 4, kind: input, shape index: {}]
  %s5 = inlined_call_operand.vmem [shape: bf16[32,32], index: 5, kind: input, shape index: {}]
  %s6 = inlined_call_operand.vmem [shape: f32[1,32], index: 6, kind: input, shape index: {}]
  %s7 = inlined_call_operand.vmem [shape: f32[1,32], index: 7, kind: input, shape index: {}]
  %s8 = inlined_call_operand.vmem [shape: f32[1,32], index: 8, kind: input, shape index: {}]
  %s9 = inlined_call_operand.vmem [shape: f32[1,32], index: 9, kind: input, shape index: {}]
  %s10 = inlined_call_operand.vmem [shape: f32[1,32], index: 10, kind: input, shape index: {}]
  %s11 = inlined_call_operand.hbm [shape: f32[2,8,32], index: 11, kind: output, shape index: {}]
  %s12 = sld [smem:[#allocation0]]
  $region101: #{tpu_custom_call.1} parent=0
    _
  %s14 = ssub.s32 1, %s12
  %s15 = scalar_select 0, %s14, %s12
  $region1: #{tpu_custom_call.1} parent=0
    #allocation6 [shape = 'u8[8192]{0}', space=vmem, size = 0x2000, scoped, tag = 'input window, operand 0']
    #allocation7 [shape = 's32[2]{0}', space=sflag, size = 0x8, scoped, tag = 'scoped memory for tpu_custom_call.1']
    #allocation8 [shape = 's32[2]{0}', space=sflag, size = 0x8, scoped, tag = 'scoped memory for tpu_custom_call.1']
    #allocation9 [shape = 'u8[8192]{0}', space=vmem, size = 0x2000, scoped, tag = 'input window, operand 1']
    #allocation10 [shape = 's32[2]{0}', space=sflag, size = 0x8, scoped, tag = 'scoped memory for tpu_custom_call.1']
    #allocation11 [shape = 'u8[8192]{0}', space=vmem, size = 0x2000, scoped, tag = 'input window, operand 2, single buffered']
    #allocation12 [shape = 'u8[8192]{0}', space=vmem, size = 0x2000, scoped, tag = 'input window, operand 3, single buffered']
    #allocation13 [shape = 's32[1]{0}', space=sflag, size = 0x4, scoped, tag = 'scoped memory for tpu_custom_call.1']
    #allocation14 [shape = 'u8[8192]{0}', space=vmem, size = 0x2000, scoped, tag = 'input window, operand 4, single buffered']
    #allocation15 [shape = 'u8[8192]{0}', space=vmem, size = 0x2000, scoped, tag = 'output window, operand 0']
    %16 = vsyncpa [#allocation7], 0
    %s17 = scalar_lea.sflag [#allocation7], 1
    %18 = vsyncpa %s17, 0
    %19 = vsyncpa [#allocation10], 0
    %s20 = scalar_lea.sflag [#allocation10], 1
    %21 = vsyncpa %s20, 0
    %22 = vsyncpa [#allocation13], 0
    %23 = vsyncpa [#allocation8], 0
    %s24 = scalar_lea.sflag [#allocation8], 1
    %25 = vsyncpa %s24, 0
    loop: start=0, step=1, limit=4
    $region2: #{tpu_custom_call.1} parent=1 // loop_pre_header
      _
    $region3: #{tpu_custom_call.1} parent=1 // loop_header
      %s27 = sphi 0, %s31
      %p28 = scmp.ge.s32.totalorder %s27, 4
      %s34 = sphi 0, %s46
      %s35 = sphi 0, %s42
      %s36 = sphi 0, %s34
      %s37 = sphi 0, %s35
      %s38 = sphi 0, %s36
      %s39 = sphi 0, %s37
      %s51 = sphi 0, %s53
      %s54 = sphi 0, %s51
      %s55 = sphi 0, %s54
      %s71 = sphi 0, %s55
      %s77 = sphi 0, %s79
      %s80 = sphi 0, %s77
      %s81 = sphi 0, %s80
      %s97 = sphi 0, %s81
      %s101 = sphi 0, %s101
      %s103 = sphi 0, %s101
      %s104 = sphi 0, %s103
      %s118 = sphi 0, %s104
      %s122 = sphi 0, %s122
      %s124 = sphi 0, %s122
      %s125 = sphi 0, %s124
      %s139 = sphi 0, %s125
      %s143 = sphi 0, %s143
      %s145 = sphi 0, %s143
      %s146 = sphi 0, %s145
      %s160 = sphi 0, %s146
      %s164 = sphi 0, %s164
      %s166 = sphi 0, %s164
      %s167 = sphi 0, %s166
      %s181 = sphi 0, %s167
      %s185 = sphi 0, %s185
      %s187 = sphi 0, %s185
      %s188 = sphi 0, %s187
      %s202 = sphi 0, %s188
      %s206 = sphi 0, %s206
      %s208 = sphi 0, %s206
      %s209 = sphi 0, %s208
      %s223 = sphi 0, %s209
      %s227 = sphi 0, %s227
      %s229 = sphi 0, %s227
      %s230 = sphi 0, %s229
      %s244 = sphi 0, %s230
      %s248 = sphi 0, %s248
      %s250 = sphi 0, %s248
      %s251 = sphi 0, %s250
      %s265 = sphi 0, %s251
      %s269 = sphi 0, %s269
      %s271 = sphi 0, %s269
      %s272 = sphi 0, %s271
      %s286 = sphi 0, %s272
      %s294 = sphi 0, %s296
      %s297 = sphi 0, %s294
      %s298 = sphi 0, %s297
      %s314 = sphi 0, %s298
    $region4: #{tpu_custom_call.1} parent=1 // loop_header_branch
      %30 = sbr.rel (%p28) target = $region8
    $region5: #{tpu_custom_call.1} parent=1 // loop_body
      %s32 = ssub.s32 %s27, 1
      %s33 = ssub.s32 %s27, 2
      %s40 = sadd.s32 1, %s35
      %p41 = scmp.ge.s32.totalorder %s40, 1
      %s42 = scalar_select %p41, 0, %s40
      %s43 = sadd.s32 1, %s34
      %s44 = scalar_select %p41, %s43, %s34
      %p45 = scmp.ge.s32.totalorder %s44, 2
      %s46 = scalar_select %p45, 0, %s44
      %s47 = ssub.s32 %s34, %s46
      %s48 = ssub.s32 %s35, %s42
      %s49 = sor.u32 %s47, %s48
      %p50 = scmp.eq.s32.totalorder %s49, 0
      %s52 = sadd.s32 %s51, 1
      %s53 = scalar_select %p50, %s51, %s52
      %p56 = pneg %p50
      %p57 = scmp.eq.s32.totalorder %s27, 1
      %p58 = por %p56, %p57
      %p59 = scmp.ne.s32.totalorder %s51, %s54
      %p60 = scmp.eq.s32.totalorder %s27, 0
      %p61 = por %p59, %p60
      %p62 = scmp.ne.s32.totalorder %s51, %s54
      %p63 = scmp.eq.s32.totalorder %s32, 1
      %p64 = por %p62, %p63
      %p65 = scmp.ne.s32.totalorder %s54, %s55
      %p66 = scmp.eq.s32.totalorder %s32, 0
      %p67 = por %p65, %p66
      %p68 = scmp.ne.s32.totalorder %s54, %s55
      %p69 = scmp.eq.s32.totalorder %s33, 1
      %p70 = por %p68, %p69
      %p72 = scmp.ne.s32.totalorder %s55, %s71
      %p73 = scmp.eq.s32.totalorder %s33, 0
      %p74 = por %p72, %p73
      %s75 = ssub.s32 %s34, %s46
      %p76 = scmp.eq.s32.totalorder %s75, 0
      %s78 = sadd.s32 %s77, 1
      %s79 = scalar_select %p76, %s77, %s78
      %p82 = pneg %p76
      %p83 = scmp.eq.s32.totalorder %s27, 1
      %p84 = por %p82, %p83
      %p85 = scmp.ne.s32.totalorder %s77, %s80
      %p86 = scmp.eq.s32.totalorder %s27, 0
      %p87 = por %p85, %p86
      %p88 = scmp.ne.s32.totalorder %s77, %s80
      %p89 = scmp.eq.s32.totalorder %s32, 1
      %p90 = por %p88, %p89
      %p91 = scmp.ne.s32.totalorder %s80, %s81
      %p92 = scmp.eq.s32.totalorder %s32, 0
      %p93 = por %p91, %p92
      %p94 = scmp.ne.s32.totalorder %s80, %s81
      %p95 = scmp.eq.s32.totalorder %s33, 1
      %p96 = por %p94, %p95
      %p98 = scmp.ne.s32.totalorder %s81, %s97
      %p99 = scmp.eq.s32.totalorder %s33, 0
      %p100 = por %p98, %p99
      %s102 = sadd.s32 %s101, 1
      %p105 = scmp.eq.s32.totalorder %s27, 1
      %p106 = scmp.ne.s32.totalorder %s101, %s103
      %p107 = scmp.eq.s32.totalorder %s27, 0
      %p108 = por %p106, %p107
      %p109 = scmp.ne.s32.totalorder %s101, %s103
      %p110 = scmp.eq.s32.totalorder %s32, 1
      %p111 = por %p109, %p110
      %p112 = scmp.ne.s32.totalorder %s103, %s104
      %p113 = scmp.eq.s32.totalorder %s32, 0
      %p114 = por %p112, %p113
      %p115 = scmp.ne.s32.totalorder %s103, %s104
      %p116 = scmp.eq.s32.totalorder %s33, 1
      %p117 = por %p115, %p116
      %p119 = scmp.ne.s32.totalorder %s104, %s118
      %p120 = scmp.eq.s32.totalorder %s33, 0
      %p121 = por %p119, %p120
      %s123 = sadd.s32 %s122, 1
      %p126 = scmp.eq.s32.totalorder %s27, 1
      %p127 = scmp.ne.s32.totalorder %s122, %s124
      %p128 = scmp.eq.s32.totalorder %s27, 0
      %p129 = por %p127, %p128
      %p130 = scmp.ne.s32.totalorder %s122, %s124
      %p131 = scmp.eq.s32.totalorder %s32, 1
      %p132 = por %p130, %p131
      %p133 = scmp.ne.s32.totalorder %s124, %s125
      %p134 = scmp.eq.s32.totalorder %s32, 0
      %p135 = por %p133, %p134
      %p136 = scmp.ne.s32.totalorder %s124, %s125
      %p137 = scmp.eq.s32.totalorder %s33, 1
      %p138 = por %p136, %p137
      %p140 = scmp.ne.s32.totalorder %s125, %s139
      %p141 = scmp.eq.s32.totalorder %s33, 0
      %p142 = por %p140, %p141
      %s144 = sadd.s32 %s143, 1
      %p147 = scmp.eq.s32.totalorder %s27, 1
      %p148 = scmp.ne.s32.totalorder %s143, %s145
      %p149 = scmp.eq.s32.totalorder %s27, 0
      %p150 = por %p148, %p149
      %p151 = scmp.ne.s32.totalorder %s143, %s145
      %p152 = scmp.eq.s32.totalorder %s32, 1
      %p153 = por %p151, %p152
      %p154 = scmp.ne.s32.totalorder %s145, %s146
      %p155 = scmp.eq.s32.totalorder %s32, 0
      %p156 = por %p154, %p155
      %p157 = scmp.ne.s32.totalorder %s145, %s146
      %p158 = scmp.eq.s32.totalorder %s33, 1
      %p159 = por %p157, %p158
      %p161 = scmp.ne.s32.totalorder %s146, %s160
      %p162 = scmp.eq.s32.totalorder %s33, 0
      %p163 = por %p161, %p162
      %s165 = sadd.s32 %s164, 1
      %p168 = scmp.eq.s32.totalorder %s27, 1
      %p169 = scmp.ne.s32.totalorder %s164, %s166
      %p170 = scmp.eq.s32.totalorder %s27, 0
      %p171 = por %p169, %p170
      %p172 = scmp.ne.s32.totalorder %s164, %s166
      %p173 = scmp.eq.s32.totalorder %s32, 1
      %p174 = por %p172, %p173
      %p175 = scmp.ne.s32.totalorder %s166, %s167
      %p176 = scmp.eq.s32.totalorder %s32, 0
      %p177 = por %p175, %p176
      %p178 = scmp.ne.s32.totalorder %s166, %s167
      %p179 = scmp.eq.s32.totalorder %s33, 1
      %p180 = por %p178, %p179
      %p182 = scmp.ne.s32.totalorder %s167, %s181
      %p183 = scmp.eq.s32.totalorder %s33, 0
      %p184 = por %p182, %p183
      %s186 = sadd.s32 %s185, 1
      %p189 = scmp.eq.s32.totalorder %s27, 1
      %p190 = scmp.ne.s32.totalorder %s185, %s187
      %p191 = scmp.eq.s32.totalorder %s27, 0
      %p192 = por %p190, %p191
      %p193 = scmp.ne.s32.totalorder %s185, %s187
      %p194 = scmp.eq.s32.totalorder %s32, 1
      %p195 = por %p193, %p194
      %p196 = scmp.ne.s32.totalorder %s187, %s188
      %p197 = scmp.eq.s32.totalorder %s32, 0
      %p198 = por %p196, %p197
      %p199 = scmp.ne.s32.totalorder %s187, %s188
      %p200 = scmp.eq.s32.totalorder %s33, 1
      %p201 = por %p199, %p200
      %p203 = scmp.ne.s32.totalorder %s188, %s202
      %p204 = scmp.eq.s32.totalorder %s33, 0
      %p205 = por %p203, %p204
      %s207 = sadd.s32 %s206, 1
      %p210 = scmp.eq.s32.totalorder %s27, 1
      %p211 = scmp.ne.s32.totalorder %s206, %s208
      %p212 = scmp.eq.s32.totalorder %s27, 0
      %p213 = por %p211, %p212
      %p214 = scmp.ne.s32.totalorder %s206, %s208
      %p215 = scmp.eq.s32.totalorder %s32, 1
      %p216 = por %p214, %p215
      %p217 = scmp.ne.s32.totalorder %s208, %s209
      %p218 = scmp.eq.s32.totalorder %s32, 0
      %p219 = por %p217, %p218
      %p220 = scmp.ne.s32.totalorder %s208, %s209
      %p221 = scmp.eq.s32.totalorder %s33, 1
      %p222 = por %p220, %p221
      %p224 = scmp.ne.s32.totalorder %s209, %s223
      %p225 = scmp.eq.s32.totalorder %s33, 0
      %p226 = por %p224, %p225
      %s228 = sadd.s32 %s227, 1
      %p231 = scmp.eq.s32.totalorder %s27, 1
      %p232 = scmp.ne.s32.totalorder %s227, %s229
      %p233 = scmp.eq.s32.totalorder %s27, 0
      %p234 = por %p232, %p233
      %p235 = scmp.ne.s32.totalorder %s227, %s229
      %p236 = scmp.eq.s32.totalorder %s32, 1
      %p237 = por %p235, %p236
      %p238 = scmp.ne.s32.totalorder %s229, %s230
      %p239 = scmp.eq.s32.totalorder %s32, 0
      %p240 = por %p238, %p239
      %p241 = scmp.ne.s32.totalorder %s229, %s230
      %p242 = scmp.eq.s32.totalorder %s33, 1
      %p243 = por %p241, %p242
      %p245 = scmp.ne.s32.totalorder %s230, %s244
      %p246 = scmp.eq.s32.totalorder %s33, 0
      %p247 = por %p245, %p246
      %s249 = sadd.s32 %s248, 1
      %p252 = scmp.eq.s32.totalorder %s27, 1
      %p253 = scmp.ne.s32.totalorder %s248, %s250
      %p254 = scmp.eq.s32.totalorder %s27, 0
      %p255 = por %p253, %p254
      %p256 = scmp.ne.s32.totalorder %s248, %s250
      %p257 = scmp.eq.s32.totalorder %s32, 1
      %p258 = por %p256, %p257
      %p259 = scmp.ne.s32.totalorder %s250, %s251
      %p260 = scmp.eq.s32.totalorder %s32, 0
      %p261 = por %p259, %p260
      %p262 = scmp.ne.s32.totalorder %s250, %s251
      %p263 = scmp.eq.s32.totalorder %s33, 1
      %p264 = por %p262, %p263
      %p266 = scmp.ne.s32.totalorder %s251, %s265
      %p267 = scmp.eq.s32.totalorder %s33, 0
      %p268 = por %p266, %p267
      %s270 = sadd.s32 %s269, 1
      %p273 = scmp.eq.s32.totalorder %s27, 1
      %p274 = scmp.ne.s32.totalorder %s269, %s271
      %p275 = scmp.eq.s32.totalorder %s27, 0
      %p276 = por %p274, %p275
      %p277 = scmp.ne.s32.totalorder %s269, %s271
      %p278 = scmp.eq.s32.totalorder %s32, 1
      %p279 = por %p277, %p278
      %p280 = scmp.ne.s32.totalorder %s271, %s272
      %p281 = scmp.eq.s32.totalorder %s32, 0
      %p282 = por %p280, %p281
      %p283 = scmp.ne.s32.totalorder %s271, %s272
      %p284 = scmp.eq.s32.totalorder %s33, 1
      %p285 = por %p283, %p284
      %p287 = scmp.ne.s32.totalorder %s272, %s286
      %p288 = scmp.eq.s32.totalorder %s33, 0
      %p289 = por %p287, %p288
      %s290 = ssub.s32 %s34, %s46
      %s291 = ssub.s32 %s35, %s42
      %s292 = sor.u32 %s290, %s291
      %p293 = scmp.eq.s32.totalorder %s292, 0
      %s295 = sadd.s32 %s294, 1
      %s296 = scalar_select %p293, %s294, %s295
      %p299 = pneg %p293
      %p300 = scmp.eq.s32.totalorder %s27, 1
      %p301 = por %p299, %p300
      %p302 = scmp.ne.s32.totalorder %s294, %s297
      %p303 = scmp.eq.s32.totalorder %s27, 0
      %p304 = por %p302, %p303
      %p305 = scmp.ne.s32.totalorder %s294, %s297
      %p306 = scmp.eq.s32.totalorder %s32, 1
      %p307 = por %p305, %p306
      %p308 = scmp.ne.s32.totalorder %s297, %s298
      %p309 = scmp.eq.s32.totalorder %s32, 0
      %p310 = por %p308, %p309
      %p311 = scmp.ne.s32.totalorder %s297, %s298
      %p312 = scmp.eq.s32.totalorder %s33, 1
      %p313 = por %p311, %p312
      %p315 = scmp.ne.s32.totalorder %s298, %s314
      %p316 = scmp.eq.s32.totalorder %s33, 0
      %p317 = por %p315, %p316
      %p318 = scmp.le.s32.totalorder 1, %s27
      %p319 = scmp.lt.s32.totalorder %s27, 3
      %p320 = pnand %p318, %p319
      %p321 = pneg %p320
      // Predicated region
      $region9: #{tpu_custom_call.1} parent=5 // pred_check
        _
      $region10: #{tpu_custom_call.1} parent=5 // pred_check_branch
        %323 = sbr.rel (%p320) target = $region12
      $region11: #{tpu_custom_call.1} parent=5 // pred_region
        %s324 = ssub.s32 %s27, 1
        // Predicated region
        $region13: #{tpu_custom_call.1} parent=11 // pred_check
          %p325 = pneg %p114
        $region14: #{tpu_custom_call.1} parent=11 // pred_check_branch
          %327 = sbr.rel (%p325) target = $region16
        $region15: #{tpu_custom_call.1} parent=11 // pred_region
          %s329 = ssub.s32 256, 256
          %330 = vsyncadd [#allocation10], %s329
          %s331 = sshll.u32 [#allocation11], 4
          %s332 = int_to_ptr.vmem [resolvable:$true] %s331
          %337 = dma.hbm_to_vmem [thread:$0]  %s2, 256, %s332, [#allocation10], 64, 64, 4
        $region16: #{tpu_custom_call.1} parent=11 // pred_fallthru
          _
        // Predicated region
        $region17: #{tpu_custom_call.1} parent=11 // pred_check
          %p338 = pneg %p135
        $region18: #{tpu_custom_call.1} parent=11 // pred_check_branch
          %340 = sbr.rel (%p338) target = $region20
        $region19: #{tpu_custom_call.1} parent=11 // pred_region
          %s342 = ssub.s32 256, 256
          %343 = vsyncadd [#allocation13], %s342
          %s344 = sshll.u32 [#allocation12], 4
          %s345 = int_to_ptr.vmem [resolvable:$true] %s344
          %350 = dma.hbm_to_vmem [thread:$0]  %s3, 256, %s345, [#allocation13], 64, 64, 4
        $region20: #{tpu_custom_call.1} parent=11 // pred_fallthru
          _
        // Predicated region
        $region21: #{tpu_custom_call.1} parent=11 // pred_check
          %p351 = pneg %p156
        $region22: #{tpu_custom_call.1} parent=11 // pred_check_branch
          %353 = sbr.rel (%p351) target = $region24
        $region23: #{tpu_custom_call.1} parent=11 // pred_region
          %s355 = ssub.s32 256, 256
          %356 = vsyncadd [#allocation13], %s355
          %s357 = sshll.u32 [#allocation14], 4
          %s358 = int_to_ptr.vmem [resolvable:$true] %s357
          %363 = dma.hbm_to_vmem [thread:$0]  %s4, 256, %s358, [#allocation13], 64, 64, 4
        $region24: #{tpu_custom_call.1} parent=11 // pred_fallthru
          _
        // Predicated region
        $region25: #{tpu_custom_call.1} parent=11 // pred_check
          %p364 = pneg %p177
        $region26: #{tpu_custom_call.1} parent=11 // pred_check_branch
          %366 = sbr.rel (%p364) target = $region28
        $region27: #{tpu_custom_call.1} parent=11 // pred_region
          _
        $region28: #{tpu_custom_call.1} parent=11 // pred_fallthru
          _
        // Predicated region
        $region29: #{tpu_custom_call.1} parent=11 // pred_check
          %p367 = pneg %p198
        $region30: #{tpu_custom_call.1} parent=11 // pred_check_branch
          %369 = sbr.rel (%p367) target = $region32
        $region31: #{tpu_custom_call.1} parent=11 // pred_region
          _
        $region32: #{tpu_custom_call.1} parent=11 // pred_fallthru
          _
        // Predicated region
        $region33: #{tpu_custom_call.1} parent=11 // pred_check
          %p370 = pneg %p219
        $region34: #{tpu_custom_call.1} parent=11 // pred_check_branch
          %372 = sbr.rel (%p370) target = $region36
        $region35: #{tpu_custom_call.1} parent=11 // pred_region
          _
        $region36: #{tpu_custom_call.1} parent=11 // pred_fallthru
          _
        // Predicated region
        $region37: #{tpu_custom_call.1} parent=11 // pred_check
          %p373 = pneg %p240
        $region38: #{tpu_custom_call.1} parent=11 // pred_check_branch
          %375 = sbr.rel (%p373) target = $region40
        $region39: #{tpu_custom_call.1} parent=11 // pred_region
          _
        $region40: #{tpu_custom_call.1} parent=11 // pred_fallthru
          _
        // Predicated region
        $region41: #{tpu_custom_call.1} parent=11 // pred_check
          %p376 = pneg %p261
        $region42: #{tpu_custom_call.1} parent=11 // pred_check_branch
          %378 = sbr.rel (%p376) target = $region44
        $region43: #{tpu_custom_call.1} parent=11 // pred_region
          _
        $region44: #{tpu_custom_call.1} parent=11 // pred_fallthru
          _
        // Predicated region
        $region45: #{tpu_custom_call.1} parent=11 // pred_check
          %p379 = pneg %p282
        $region46: #{tpu_custom_call.1} parent=11 // pred_check_branch
          %381 = sbr.rel (%p379) target = $region48
        $region47: #{tpu_custom_call.1} parent=11 // pred_region
          _
        $region48: #{tpu_custom_call.1} parent=11 // pred_fallthru
          _
      $region12: #{tpu_custom_call.1} parent=5 // pred_fallthru
        _
      %p382 = scmp.lt.s32.totalorder %s27, 2
      // Predicated region
      $region49: #{tpu_custom_call.1} parent=5 // pred_check
        %p383 = pneg %p382
      $region50: #{tpu_custom_call.1} parent=5 // pred_check_branch
        %385 = sbr.rel (%p383) target = $region52
      $region51: #{tpu_custom_call.1} parent=5 // pred_region
        // Predicated region
        $region53: #{tpu_custom_call.1} parent=51 // pred_check
          %p386 = pneg %p61
        $region54: #{tpu_custom_call.1} parent=51 // pred_check_branch
          %388 = sbr.rel (%p386) target = $region56
        $region55: #{tpu_custom_call.1} parent=51 // pred_region
          %s389 = sand.u32 %s51, 1
          %s390 = scalar_lea.sflag [#allocation7], %s389
          %s391 = sand.u32 %s51, 1
          %s392 = smul.addr %s391, 8
          %s393 = scalar_lea.vmem [#allocation6], %s392
          %s395 = ssub.s32 128, 128
          %396 = vsyncadd %s390, %s395
          %s397 = sadd.s32 %s35, %s34
          %s398 = smul.addr %s397, 128
          %s399 = scalar_lea.hbm %s0, %s398
          %s401 = sshll.u32 %s393, 4
          %s402 = int_to_ptr.vmem [resolvable:$true] %s401
          %404 = dma.hbm_to_vmem [thread:$0]  %s399, 128, %s402, %s390
        $region56: #{tpu_custom_call.1} parent=51 // pred_fallthru
          _
        // Predicated region
        $region57: #{tpu_custom_call.1} parent=51 // pred_check
          %p405 = pneg %p87
        $region58: #{tpu_custom_call.1} parent=51 // pred_check_branch
          %407 = sbr.rel (%p405) target = $region60
        $region59: #{tpu_custom_call.1} parent=51 // pred_region
          %s408 = sand.u32 %s27, 1
          %s409 = scalar_lea.sflag [#allocation10], %s408
          %s410 = sand.u32 %s77, 1
          %s411 = smul.addr %s410, 8
          %s412 = scalar_lea.vmem [#allocation9], %s411
          %s414 = ssub.s32 128, 128
          %415 = vsyncadd %s409, %s414
          %s416 = smul.addr %s34, 2
          %s417 = smul.addr %s416, 64
          %s418 = scalar_lea.hbm %s1, %s417
          %s419 = sshll.u32 %s412, 4
          %s420 = int_to_ptr.vmem [resolvable:$true] %s419
          %425 = dma.hbm_to_vmem [thread:$0]  %s418, 128, %s420, %s409, 64, 64, 4
        $region60: #{tpu_custom_call.1} parent=51 // pred_fallthru
          _
      $region52: #{tpu_custom_call.1} parent=5 // pred_fallthru
        _
      %p426 = scmp.le.s32.totalorder 1, %s27
      %p427 = scmp.lt.s32.totalorder %s27, 3
      %p428 = pnand %p426, %p427
      %p429 = pneg %p428
      // Predicated region
      $region61: #{tpu_custom_call.1} parent=5 // pred_check
        _
      $region62: #{tpu_custom_call.1} parent=5 // pred_check_branch
        %431 = sbr.rel (%p428) target = $region64
      $region63: #{tpu_custom_call.1} parent=5 // pred_region
        %s432 = ssub.s32 %s27, 1
        %s433 = sand.u32 %s54, 1
        %s434 = scalar_lea.sflag [#allocation7], %s433
        %s435 = sand.u32 %s54, 1
        %s436 = smul.addr %s435, 8
        %s437 = scalar_lea.vmem [#allocation6], %s436
        // Predicated region
        $region65: #{tpu_custom_call.1} parent=63 // pred_check
          %p438 = pneg %p67
        $region66: #{tpu_custom_call.1} parent=63 // pred_check_branch
          %440 = sbr.rel (%p438) target = $region68
        $region67: #{tpu_custom_call.1} parent=63 // pred_region
          %441 = dma.done %s434, 128
        $region68: #{tpu_custom_call.1} parent=63 // pred_fallthru
          _
        %s442 = sand.u32 %s32, 1
        %s443 = scalar_lea.sflag [#allocation10], %s442
        %s444 = sand.u32 %s80, 1
        %s445 = smul.addr %s444, 8
        %s446 = scalar_lea.vmem [#allocation9], %s445
        // Predicated region
        $region69: #{tpu_custom_call.1} parent=63 // pred_check
          %p447 = pneg %p93
        $region70: #{tpu_custom_call.1} parent=63 // pred_check_branch
          %449 = sbr.rel (%p447) target = $region72
        $region71: #{tpu_custom_call.1} parent=63 // pred_region
          %450 = dma.done %s443, 128
        $region72: #{tpu_custom_call.1} parent=63 // pred_fallthru
          _
        // Predicated region
        $region73: #{tpu_custom_call.1} parent=63 // pred_check
          %p451 = pneg %p114
        $region74: #{tpu_custom_call.1} parent=63 // pred_check_branch
          %453 = sbr.rel (%p451) target = $region76
        $region75: #{tpu_custom_call.1} parent=63 // pred_region
          %454 = dma.done [#allocation10], 256
        $region76: #{tpu_custom_call.1} parent=63 // pred_fallthru
          _
        // Predicated region
        $region77: #{tpu_custom_call.1} parent=63 // pred_check
          %p455 = pneg %p135
        $region78: #{tpu_custom_call.1} parent=63 // pred_check_branch
          %457 = sbr.rel (%p455) target = $region80
        $region79: #{tpu_custom_call.1} parent=63 // pred_region
          %458 = dma.done [#allocation13], 256
        $region80: #{tpu_custom_call.1} parent=63 // pred_fallthru
          _
        // Predicated region
        $region81: #{tpu_custom_call.1} parent=63 // pred_check
          %p459 = pneg %p156
        $region82: #{tpu_custom_call.1} parent=63 // pred_check_branch
          %461 = sbr.rel (%p459) target = $region84
        $region83: #{tpu_custom_call.1} parent=63 // pred_region
          %462 = dma.done [#allocation13], 256
        $region84: #{tpu_custom_call.1} parent=63 // pred_fallthru
          _
        %s463 = sand.u32 %s54, 1
        %s464 = scalar_lea.sflag [#allocation7], %s463
        %s465 = sand.u32 %s54, 1
        %s466 = smul.addr %s465, 8
        %s467 = scalar_lea.vmem [#allocation6], %s466
        %p468 = pneg %p67
        %p469 = pneg %p64
        %s470 = sand.u32 %s32, 1
        %s471 = scalar_lea.sflag [#allocation10], %s470
        %s472 = sand.u32 %s80, 1
        %s473 = smul.addr %s472, 8
        %s474 = scalar_lea.vmem [#allocation9], %s473
        %p475 = pneg %p93
        %p476 = pneg %p90
        %p477 = pneg %p114
        %p478 = pneg %p111
        %p479 = pneg %p135
        %p480 = pneg %p132
        %p481 = pneg %p156
        %p482 = pneg %p153
        %p483 = pneg %p177
        %p484 = pneg %p174
        %p485 = pneg %p198
        %p486 = pneg %p195
        %p487 = pneg %p219
        %p488 = pneg %p216
        %p489 = pneg %p240
        %p490 = pneg %p237
        %p491 = pneg %p261
        %p492 = pneg %p258
        %p493 = pneg %p282
        %p494 = pneg %p279
        %p495 = pneg %p310
        %p496 = pneg %p307
        %s497 = sand.u32 %s297, 1
        %s498 = scalar_lea.sflag [#allocation8], %s497
        %s499 = sand.u32 %s297, 1
        %s500 = smul.addr %s499, 8
        %s501 = scalar_lea.vmem [#allocation15], %s500
        %p503 = scmp.eq.s32.totalorder %s37, 0
        // Predicated region
        $region85: #{tpu_custom_call.1} parent=63 // pred_check
          %p504 = pneg %p503
        $region86: #{tpu_custom_call.1} parent=63 // pred_check_branch
          %506 = sbr.rel (%p504) target = $region88
        $region87: #{tpu_custom_call.1} parent=63 // pred_region
          %v507 = vld [vmem:[%s446] sm:$0xf]
          %v508 = vld [vmem:[%s446 + $0x4] sm:$0xf]
          %v509 = vld [vmem:[#allocation12] sm:$0xf]
          %v510 = vld [vmem:[#allocation12 + $0x4] sm:$0xf]
          %v511 = vld [vmem:[#allocation12 + $0x8] sm:$0xf]
          %v512 = vld [vmem:[#allocation12 + $0xc] sm:$0xf]
          %v513 = vld [vmem:[%s7] sm:$0x1]
          %v515 = vlaneseq
          %v516 = vshrl.u32 %v515, 7
          %v517 = vsub.s32 0, %v516
          %v518 = vrot.slane %v513, %v517
          %v522 = vunpack.c.l.b16 %v507
          %v523 = vunpack.c.l.b16 %v508
          %v524 = vpack.c.b16 %v523, %v522
          %v529 = vunpack.c.l.b16 %v509
          %v530 = vunpack.c.l.b16 %v510
          %v531 = vunpack.c.l.b16 %v511
          %v532 = vunpack.c.l.b16 %v512
          %v533 = vpack.c.b16 %v530, %v529
          %v534 = vpack.c.b16 %v532, %v531
          %vm535 = vcmask 261120
          %v537 = vsel %vm535, %v524, 0
          %v540 = vsel %vm535, %v533, 0
          %v543 = vsel %vm535, %v534, 0
          %545 = vmatprep.subr.bf16.mxu0 0
          %546 = vmatpush1.bf16.xpose.msra.mxu0 %v540
          %547 = vmatprep.subr.bf16.mxu0 0
          %548 = vmatpush1.bf16.xpose.msra.mxu0 %v543
          %549 = vmatprep.subr.bf16.mxu0 0
          %550 = vmatpush1.bf16.xpose.msra.mxu0 0
          %551 = vmatprep.subr.bf16.mxu0 0
          %552 = vmatpush1.bf16.xpose.msra.mxu0 0
          %553 = vmatprep.subr.bf16.mxu0 0
          %554 = vmatpush1.bf16.xpose.msra.mxu0 0
          %555 = vmatprep.subr.bf16.mxu0 0
          %556 = vmatpush1.bf16.xpose.msra.mxu0 0
          %557 = vmatprep.subr.bf16.mxu0 0
          %558 = vmatpush1.bf16.xpose.msra.mxu0 0
          %559 = vmatprep.subr.bf16.mxu0 0
          %560 = vmatpush1.bf16.xpose.msra.mxu0 0
          %561 = vmatprep.subr.bf16.mxu0 0
          %562 = vmatpush1.bf16.xpose.msra.mxu0 0
          %563 = vmatprep.subr.bf16.mxu0 0
          %564 = vmatpush1.bf16.xpose.msra.mxu0 0
          %565 = vmatprep.subr.bf16.mxu0 0
          %566 = vmatpush1.bf16.xpose.msra.mxu0 0
          %567 = vmatprep.subr.bf16.mxu0 0
          %568 = vmatpush1.bf16.xpose.msra.mxu0 0
          %569 = vmatprep.subr.bf16.mxu0 0
          %570 = vmatpush1.bf16.xpose.msra.mxu0 0
          %571 = vmatprep.subr.bf16.mxu0 0
          %572 = vmatpush1.bf16.xpose.msra.mxu0 0
          %573 = vmatprep.subr.bf16.mxu0 0
          %574 = vmatpush1.bf16.xpose.msra.mxu0 0
          %575 = vmatprep.subr.bf16.mxu0 0
          %576 = vmatpush1.bf16.xpose.msra.mxu0 0
          %577 = vmatprep.mubr.bf16.mxu0 0
          %578 = vmatmul.mubr.bf16.gmra.mrb[0].mxu0 %v537
          %v579 = vpop.f32.mrb[0].mxu0
          %v580 = vadd.f32 %v518, %v579
          %v581 = vpop.f32.mrb[0].mxu0
          %v582 = vpop.f32.mrb[0].mxu0
          %v583 = vadd.f32 %v518, %v582
          %v584 = vpop.f32.mrb[0].mxu0
          %585 = vdwg.mxu0
          %v586 = vld [vmem:[#allocation14] sm:$0xf]
          %v587 = vld [vmem:[#allocation14 + $0x4] sm:$0xf]
          %v588 = vld [vmem:[#allocation14 + $0x8] sm:$0xf]
          %v589 = vld [vmem:[#allocation14 + $0xc] sm:$0xf]
          %v590 = vld [vmem:[%s8] sm:$0x1]
          %v592 = vlaneseq
          %v593 = vshrl.u32 %v592, 7
          %v594 = vsub.s32 0, %v593
          %v595 = vrot.slane %v590, %v594
          %v601 = vunpack.c.l.b16 %v586
          %v602 = vunpack.c.l.b16 %v587
          %v603 = vunpack.c.l.b16 %v588
          %v604 = vunpack.c.l.b16 %v589
          %v605 = vpack.c.b16 %v602, %v601
          %v606 = vpack.c.b16 %v604, %v603
          %v608 = vsel %vm535, %v605, 0
          %v611 = vsel %vm535, %v606, 0
          %613 = vmatprep.subr.bf16.mxu0 0
          %614 = vmatpush1.bf16.xpose.msra.mxu0 %v608
          %615 = vmatprep.subr.bf16.mxu0 0
          %616 = vmatpush1.bf16.xpose.msra.mxu0 %v611
          %617 = vmatprep.subr.bf16.mxu0 0
          %618 = vmatpush1.bf16.xpose.msra.mxu0 0
          %619 = vmatprep.subr.bf16.mxu0 0
          %620 = vmatpush1.bf16.xpose.msra.mxu0 0
          %621 = vmatprep.subr.bf16.mxu0 0
          %622 = vmatpush1.bf16.xpose.msra.mxu0 0
          %623 = vmatprep.subr.bf16.mxu0 0
          %624 = vmatpush1.bf16.xpose.msra.mxu0 0
          %625 = vmatprep.subr.bf16.mxu0 0
          %626 = vmatpush1.bf16.xpose.msra.mxu0 0
          %627 = vmatprep.subr.bf16.mxu0 0
          %628 = vmatpush1.bf16.xpose.msra.mxu0 0
          %629 = vmatprep.subr.bf16.mxu0 0
          %630 = vmatpush1.bf16.xpose.msra.mxu0 0
          %631 = vmatprep.subr.bf16.mxu0 0
          %632 = vmatpush1.bf16.xpose.msra.mxu0 0
          %633 = vmatprep.subr.bf16.mxu0 0
          %634 = vmatpush1.bf16.xpose.msra.mxu0 0
          %635 = vmatprep.subr.bf16.mxu0 0
          %636 = vmatpush1.bf16.xpose.msra.mxu0 0
          %637 = vmatprep.subr.bf16.mxu0 0
          %638 = vmatpush1.bf16.xpose.msra.mxu0 0
          %639 = vmatprep.subr.bf16.mxu0 0
          %640 = vmatpush1.bf16.xpose.msra.mxu0 0
          %641 = vmatprep.subr.bf16.mxu0 0
          %642 = vmatpush1.bf16.xpose.msra.mxu0 0
          %643 = vmatprep.subr.bf16.mxu0 0
          %644 = vmatpush1.bf16.xpose.msra.mxu0 0
          %645 = vmatprep.mubr.bf16.mxu0 0
          %646 = vmatmul.mubr.bf16.gmra.mrb[0].mxu0 %v537
          %v647 = vpop.f32.mrb[0].mxu0
          %v648 = vadd.f32 %v595, %v647
          %v649 = vpop.f32.mrb[0].mxu0
          %v650 = vpop.f32.mrb[0].mxu0
          %v651 = vadd.f32 %v595, %v650
          %v652 = vpop.f32.mrb[0].mxu0
          %653 = vdwg.mxu0
          %v654 = vpack.c.bf16 %v583, %v580
          %655 = vst.msk [vmem:[#allocation3] sm:$0xff] %vm535, %v654
          %v656 = vpack.c.bf16 %v651, %v648
          %657 = vst.msk [vmem:[#allocation4] sm:$0xff] %vm535, %v656
        $region88: #{tpu_custom_call.1} parent=63 // pred_fallthru
          _
        %v658 = vld [vmem:[%s437] sm:$0xff]
        %v659 = vadd.f32 %v658, 1e-06
        %v660 = vadd.f32 %v659, 1e-06
        %v661 = vmul.f32 %v660, %v660
        %vm662 = vcmask 261120
        %v663 = vsel %vm662, %v661, 0.0
        %664 = vadd.xlane.f32.xlu0 %v663
        %v665 = vpop.xlane.xlu0 %664
        %v666 = vrsqrt.pop %v665
        %v667 = vmul.f32 %v665, %v666
        %vm668 = vcmp.eq.f32.partialorder %v665, inf
        %v669 = vsel %vm668, %v665, %v667
        %vm670 = vcmp.eq.f32.partialorder %v665, 0.0
        %v671 = vand.u32 %v665, 2147483648
        %v672 = vsel %vm670, %v671, %v669
        %v673 = vmul.f32 %v672, 5.656854
        %v674 = vadd.f32 %v673, 1e-06
        %v675 = vrcp.pop %v674
        %v676 = vmul.f32 %v659, %v675
        %v677 = vld [vmem:[%s10] sm:$0x1]
        %v679 = vlaneseq
        %v680 = vshrl.u32 %v679, 7
        %v681 = vsub.s32 0, %v680
        %v682 = vrot.slane %v677, %v681
        %v684 = vmul.f32 %v676, %v682
        %v685 = vpack.c.bf16 %v684, %v684
        %v686 = vld [vmem:[#allocation11] sm:$0xf]
        %v687 = vld [vmem:[#allocation11 + $0x4] sm:$0xf]
        %v688 = vld [vmem:[#allocation11 + $0x8] sm:$0xf]
        %v689 = vld [vmem:[#allocation11 + $0xc] sm:$0xf]
        %v690 = vld [vmem:[%s6] sm:$0x1]
        %v692 = vlaneseq
        %v693 = vshrl.u32 %v692, 7
        %v694 = vsub.s32 0, %v693
        %v695 = vrot.slane %v690, %v694
        %v701 = vunpack.c.l.b16 %v686
        %v702 = vunpack.c.l.b16 %v687
        %v703 = vunpack.c.l.b16 %v688
        %v704 = vunpack.c.l.b16 %v689
        %v705 = vpack.c.b16 %v702, %v701
        %v706 = vpack.c.b16 %v704, %v703
        %v708 = vsel %vm662, %v685, 0
        %v711 = vsel %vm662, %v705, 0
        %v714 = vsel %vm662, %v706, 0
        %716 = vmatprep.subr.bf16.mxu0 0
        %717 = vmatpush1.bf16.xpose.msra.mxu0 %v711
        %718 = vmatprep.subr.bf16.mxu0 0
        %719 = vmatpush1.bf16.xpose.msra.mxu0 %v714
        %720 = vmatprep.subr.bf16.mxu0 0
        %721 = vmatpush1.bf16.xpose.msra.mxu0 0
        %722 = vmatprep.subr.bf16.mxu0 0
        %723 = vmatpush1.bf16.xpose.msra.mxu0 0
        %724 = vmatprep.subr.bf16.mxu0 0
        %725 = vmatpush1.bf16.xpose.msra.mxu0 0
        %726 = vmatprep.subr.bf16.mxu0 0
        %727 = vmatpush1.bf16.xpose.msra.mxu0 0
        %728 = vmatprep.subr.bf16.mxu0 0
        %729 = vmatpush1.bf16.xpose.msra.mxu0 0
        %730 = vmatprep.subr.bf16.mxu0 0
        %731 = vmatpush1.bf16.xpose.msra.mxu0 0
        %732 = vmatprep.subr.bf16.mxu0 0
        %733 = vmatpush1.bf16.xpose.msra.mxu0 0
        %734 = vmatprep.subr.bf16.mxu0 0
        %735 = vmatpush1.bf16.xpose.msra.mxu0 0
        %736 = vmatprep.subr.bf16.mxu0 0
        %737 = vmatpush1.bf16.xpose.msra.mxu0 0
        %738 = vmatprep.subr.bf16.mxu0 0
        %739 = vmatpush1.bf16.xpose.msra.mxu0 0
        %740 = vmatprep.subr.bf16.mxu0 0
        %741 = vmatpush1.bf16.xpose.msra.mxu0 0
        %742 = vmatprep.subr.bf16.mxu0 0
        %743 = vmatpush1.bf16.xpose.msra.mxu0 0
        %744 = vmatprep.subr.bf16.mxu0 0
        %745 = vmatpush1.bf16.xpose.msra.mxu0 0
        %746 = vmatprep.subr.bf16.mxu0 0
        %747 = vmatpush1.bf16.xpose.msra.mxu0 0
        %748 = vmatprep.mubr.bf16.mxu0 0
        %749 = vmatmul.mubr.bf16.gmra.mrb[0].mxu0 %v708
        %v750 = vpop.f32.mrb[0].mxu0
        %v751 = vadd.f32 %v695, %v750
        %v752 = vpop.f32.mrb[0].mxu0
        %v753 = vpop.f32.mrb[0].mxu0
        %v754 = vpop.f32.mrb[0].mxu0
        %755 = vdwg.mxu0
        %v756 = vpack.c.bf16 %v751, %v751
        %vm757 = vcmask 257024
        %758 = vst.msk [vmem:[#allocation2] sm:$0xf] %vm757, %v756
        %v759 = vld [vmem:[#allocation2] sm:$0xf]
        %v760 = vld [vmem:[#allocation3] sm:$0xff]
        %v761 = vld [vmem:[#allocation4] sm:$0xff]
        %vm762 = vcmask 64512
        %v764 = vsel %vm762, %v759, 0
        %v767 = vsel %vm762, %v760, 0
        %769 = vmatprep.subr.bf16.mxu0 0
        %770 = vmatpush1.bf16.xpose.msra.mxu0 %v767
        %771 = vmatprep.subr.bf16.mxu0 0
        %772 = vmatpush1.bf16.xpose.msra.mxu0 0
        %773 = vmatprep.subr.bf16.mxu0 0
        %774 = vmatpush1.bf16.xpose.msra.mxu0 0
        %775 = vmatprep.subr.bf16.mxu0 0
        %776 = vmatpush1.bf16.xpose.msra.mxu0 0
        %777 = vmatprep.subr.bf16.mxu0 0
        %778 = vmatpush1.bf16.xpose.msra.mxu0 0
        %779 = vmatprep.subr.bf16.mxu0 0
        %780 = vmatpush1.bf16.xpose.msra.mxu0 0
        %781 = vmatprep.subr.bf16.mxu0 0
        %782 = vmatpush1.bf16.xpose.msra.mxu0 0
        %783 = vmatprep.subr.bf16.mxu0 0
        %784 = vmatpush1.bf16.xpose.msra.mxu0 0
        %785 = vmatprep.subr.bf16.mxu0 0
        %786 = vmatpush1.bf16.xpose.msra.mxu0 0
        %787 = vmatprep.subr.bf16.mxu0 0
        %788 = vmatpush1.bf16.xpose.msra.mxu0 0
        %789 = vmatprep.subr.bf16.mxu0 0
        %790 = vmatpush1.bf16.xpose.msra.mxu0 0
        %791 = vmatprep.subr.bf16.mxu0 0
        %792 = vmatpush1.bf16.xpose.msra.mxu0 0
        %793 = vmatprep.subr.bf16.mxu0 0
        %794 = vmatpush1.bf16.xpose.msra.mxu0 0
        %795 = vmatprep.subr.bf16.mxu0 0
        %796 = vmatpush1.bf16.xpose.msra.mxu0 0
        %797 = vmatprep.subr.bf16.mxu0 0
        %798 = vmatpush1.bf16.xpose.msra.mxu0 0
        %799 = vmatprep.subr.bf16.mxu0 0
        %800 = vmatpush1.bf16.xpose.msra.mxu0 0
        %801 = vmatprep.mubr.bf16.mxu0 0
        %802 = vmatmul.mubr.bf16.gmra.mrb[0].mxu0 %v764
        %v803 = vpop.f32.mrb[0].mxu0
        %v804 = vadd.f32 0.0, %v803
        %v805 = vpop.f32.mrb[0].mxu0
        %v806 = vpop.f32.mrb[0].mxu0
        %v807 = vpop.f32.mrb[0].mxu0
        %808 = vdwg.mxu0
        %vm809 = vcmask 130048
        %v810 = vsel %vm809, %v804, -inf
        %811 = vmax.xlane.f32.xlu0 %v810
        %v812 = vpop.xlane.xlu0 %811
        %v813 = vsub.f32 %v804, %v812
        %v814 = vmul.f32 %v813, 1.442695
        %v815 = vpow.pop %v814
        %v816 = vsel %vm809, %v815, 0.0
        %817 = vadd.xlane.f32.xlu0 %v816
        %v818 = vpop.xlane.xlu0 %817
        %v819 = vpack.c.bf16 %v815, %v815
        %v821 = vsel %vm809, %v819, 0
        %823 = vmatprep.subr.bf16.mxu0 0
        %824 = vmatpush1.bf16.msra.mxu0 %v761
        %825 = vmatprep.subr.bf16.mxu0 0
        %826 = vmatpush1.bf16.msra.mxu0 0
        %827 = vmatprep.subr.bf16.mxu0 0
        %828 = vmatpush1.bf16.msra.mxu0 0
        %829 = vmatprep.subr.bf16.mxu0 0
        %830 = vmatpush1.bf16.msra.mxu0 0
        %831 = vmatprep.subr.bf16.mxu0 0
        %832 = vmatpush1.bf16.msra.mxu0 0
        %833 = vmatprep.subr.bf16.mxu0 0
        %834 = vmatpush1.bf16.msra.mxu0 0
        %835 = vmatprep.subr.bf16.mxu0 0
        %836 = vmatpush1.bf16.msra.mxu0 0
        %837 = vmatprep.subr.bf16.mxu0 0
        %838 = vmatpush1.bf16.msra.mxu0 0
        %839 = vmatprep.subr.bf16.mxu0 0
        %840 = vmatpush1.bf16.msra.mxu0 0
        %841 = vmatprep.subr.bf16.mxu0 0
        %842 = vmatpush1.bf16.msra.mxu0 0
        %843 = vmatprep.subr.bf16.mxu0 0
        %844 = vmatpush1.bf16.msra.mxu0 0
        %845 = vmatprep.subr.bf16.mxu0 0
        %846 = vmatpush1.bf16.msra.mxu0 0
        %847 = vmatprep.subr.bf16.mxu0 0
        %848 = vmatpush1.bf16.msra.mxu0 0
        %849 = vmatprep.subr.bf16.mxu0 0
        %850 = vmatpush1.bf16.msra.mxu0 0
        %851 = vmatprep.subr.bf16.mxu0 0
        %852 = vmatpush1.bf16.msra.mxu0 0
        %853 = vmatprep.subr.bf16.mxu0 0
        %854 = vmatpush1.bf16.msra.mxu0 0
        %855 = vmatprep.mubr.bf16.mxu0 0
        %856 = vmatmul.mubr.bf16.gmra.mrb[0].mxu0 %v821
        %v857 = vpop.f32.mrb[0].mxu0
        %v858 = vadd.f32 0.0, %v857
        %v859 = vpop.f32.mrb[0].mxu0
        %v860 = vpop.f32.mrb[0].mxu0
        %v861 = vpop.f32.mrb[0].mxu0
        %862 = vdwg.mxu0
        %v863 = vrcp.pop %v818
        %v864 = vmul.f32 %v858, %v863
        %v865 = vpack.c.bf16 %v864, %v864
        %vm866 = vcmask 60416
        %867 = vst.msk [vmem:[#allocation5] sm:$0xf] %vm866, %v865
        %v868 = vld [vmem:[#allocation2] sm:$0xf]
        %v869 = vld [vmem:[#allocation3] sm:$0xff]
        %v870 = vld [vmem:[#allocation4] sm:$0xff]
        %v872 = vunpack.c.l.b16 %v868
        %v873 = vpack.c.b16 %v872, %v872
        %874 = vrot.lane.b32.xlu0 %v873, 120
        %v875 = vpop.permute.xlu0 %874
        %877 = vrot.lane.b32.xlu0 %v869, 120
        %v878 = vpop.permute.xlu0 %877
        %v880 = vsel %vm762, %v875, 0
        %v883 = vsel %vm762, %v878, 0
        %885 = vmatprep.subr.bf16.mxu0 0
        %886 = vmatpush1.bf16.xpose.msra.mxu0 %v883
        %887 = vmatprep.subr.bf16.mxu0 0
        %888 = vmatpush1.bf16.xpose.msra.mxu0 0
        %889 = vmatprep.subr.bf16.mxu0 0
        %890 = vmatpush1.bf16.xpose.msra.mxu0 0
        %891 = vmatprep.subr.bf16.mxu0 0
        %892 = vmatpush1.bf16.xpose.msra.mxu0 0
        %893 = vmatprep.subr.bf16.mxu0 0
        %894 = vmatpush1.bf16.xpose.msra.mxu0 0
        %895 = vmatprep.subr.bf16.mxu0 0
        %896 = vmatpush1.bf16.xpose.msra.mxu0 0
        %897 = vmatprep.subr.bf16.mxu0 0
        %898 = vmatpush1.bf16.xpose.msra.mxu0 0
        %899 = vmatprep.subr.bf16.mxu0 0
        %900 = vmatpush1.bf16.xpose.msra.mxu0 0
        %901 = vmatprep.subr.bf16.mxu0 0
        %902 = vmatpush1.bf16.xpose.msra.mxu0 0
        %903 = vmatprep.subr.bf16.mxu0 0
        %904 = vmatpush1.bf16.xpose.msra.mxu0 0
        %905 = vmatprep.subr.bf16.mxu0 0
        %906 = vmatpush1.bf16.xpose.msra.mxu0 0
        %907 = vmatprep.subr.bf16.mxu0 0
        %908 = vmatpush1.bf16.xpose.msra.mxu0 0
        %909 = vmatprep.subr.bf16.mxu0 0
        %910 = vmatpush1.bf16.xpose.msra.mxu0 0
        %911 = vmatprep.subr.bf16.mxu0 0
        %912 = vmatpush1.bf16.xpose.msra.mxu0 0
        %913 = vmatprep.subr.bf16.mxu0 0
        %914 = vmatpush1.bf16.xpose.msra.mxu0 0
        %915 = vmatprep.subr.bf16.mxu0 0
        %916 = vmatpush1.bf16.xpose.msra.mxu0 0
        %917 = vmatprep.mubr.bf16.mxu0 0
        %918 = vmatmul.mubr.bf16.gmra.mrb[0].mxu0 %v880
        %v919 = vpop.f32.mrb[0].mxu0
        %v920 = vadd.f32 0.0, %v919
        %v921 = vpop.f32.mrb[0].mxu0
        %v922 = vpop.f32.mrb[0].mxu0
        %v923 = vpop.f32.mrb[0].mxu0
        %924 = vdwg.mxu0
        %v925 = vsel %vm809, %v920, -inf
        %926 = vmax.xlane.f32.xlu0 %v925
        %v927 = vpop.xlane.xlu0 %926
        %v928 = vsub.f32 %v920, %v927
        %v929 = vmul.f32 %v928, 1.442695
        %v930 = vpow.pop %v929
        %v931 = vsel %vm809, %v930, 0.0
        %932 = vadd.xlane.f32.xlu0 %v931
        %v933 = vpop.xlane.xlu0 %932
        %v934 = vpack.c.bf16 %v930, %v930
        %936 = vrot.lane.b32.xlu0 %v870, 120
        %v937 = vpop.permute.xlu0 %936
        %v940 = vsel %vm809, %v934, 0
        %942 = vmatprep.subr.bf16.mxu0 0
        %943 = vmatpush1.bf16.msra.mxu0 %v937
        %944 = vmatprep.subr.bf16.mxu0 0
        %945 = vmatpush1.bf16.msra.mxu0 0
        %946 = vmatprep.subr.bf16.mxu0 0
        %947 = vmatpush1.bf16.msra.mxu0 0
        %948 = vmatprep.subr.bf16.mxu0 0
        %949 = vmatpush1.bf16.msra.mxu0 0
        %950 = vmatprep.subr.bf16.mxu0 0
        %951 = vmatpush1.bf16.msra.mxu0 0
        %952 = vmatprep.subr.bf16.mxu0 0
        %953 = vmatpush1.bf16.msra.mxu0 0
        %954 = vmatprep.subr.bf16.mxu0 0
        %955 = vmatpush1.bf16.msra.mxu0 0
        %956 = vmatprep.subr.bf16.mxu0 0
        %957 = vmatpush1.bf16.msra.mxu0 0
        %958 = vmatprep.subr.bf16.mxu0 0
        %959 = vmatpush1.bf16.msra.mxu0 0
        %960 = vmatprep.subr.bf16.mxu0 0
        %961 = vmatpush1.bf16.msra.mxu0 0
        %962 = vmatprep.subr.bf16.mxu0 0
        %963 = vmatpush1.bf16.msra.mxu0 0
        %964 = vmatprep.subr.bf16.mxu0 0
        %965 = vmatpush1.bf16.msra.mxu0 0
        %966 = vmatprep.subr.bf16.mxu0 0
        %967 = vmatpush1.bf16.msra.mxu0 0
        %968 = vmatprep.subr.bf16.mxu0 0
        %969 = vmatpush1.bf16.msra.mxu0 0
        %970 = vmatprep.subr.bf16.mxu0 0
        %971 = vmatpush1.bf16.msra.mxu0 0
        %972 = vmatprep.subr.bf16.mxu0 0
        %973 = vmatpush1.bf16.msra.mxu0 0
        %974 = vmatprep.mubr.bf16.mxu0 0
        %975 = vmatmul.mubr.bf16.gmra.mrb[0].mxu0 %v940
        %v976 = vpop.f32.mrb[0].mxu0
        %v977 = vadd.f32 0.0, %v976
        %v978 = vpop.f32.mrb[0].mxu0
        %v979 = vpop.f32.mrb[0].mxu0
        %v980 = vpop.f32.mrb[0].mxu0
        %981 = vdwg.mxu0
        %v982 = vrcp.pop %v933
        %v983 = vmul.f32 %v977, %v982
        %v984 = vpack.c.bf16 %v983, %v983
        %v986 = vunpack.c.l.b16 %v984
        %v987 = vpack.c.b16 %v986, %v986
        %988 = vrot.lane.b32.xlu0 %v987, 8
        %v989 = vpop.permute.xlu0 %988
        %vm991 = vcmask 126016
        %992 = vst.msk [vmem:[#allocation5] sm:$0xf] %vm991, %v989
        %v993 = vld [vmem:[#allocation2] sm:$0xf]
        %v994 = vld [vmem:[#allocation3] sm:$0xff]
        %v995 = vld [vmem:[#allocation4] sm:$0xff]
        %v997 = vunpack.c.l.b16 %v993
        %v998 = vpack.c.b16 %v997, %v997
        %999 = vrot.lane.b32.xlu0 %v998, 112
        %v1000 = vpop.permute.xlu0 %999
        %1002 = vrot.lane.b32.xlu0 %v994, 112
        %v1003 = vpop.permute.xlu0 %1002
        %v1005 = vsel %vm762, %v1000, 0
        %v1008 = vsel %vm762, %v1003, 0
        %1010 = vmatprep.subr.bf16.mxu0 0
        %1011 = vmatpush1.bf16.xpose.msra.mxu0 %v1008
        %1012 = vmatprep.subr.bf16.mxu0 0
        %1013 = vmatpush1.bf16.xpose.msra.mxu0 0
        %1014 = vmatprep.subr.bf16.mxu0 0
        %1015 = vmatpush1.bf16.xpose.msra.mxu0 0
        %1016 = vmatprep.subr.bf16.mxu0 0
        %1017 = vmatpush1.bf16.xpose.msra.mxu0 0
        %1018 = vmatprep.subr.bf16.mxu0 0
        %1019 = vmatpush1.bf16.xpose.msra.mxu0 0
        %1020 = vmatprep.subr.bf16.mxu0 0
        %1021 = vmatpush1.bf16.xpose.msra.mxu0 0
        %1022 = vmatprep.subr.bf16.mxu0 0
        %1023 = vmatpush1.bf16.xpose.msra.mxu0 0
        %1024 = vmatprep.subr.bf16.mxu0 0
        %1025 = vmatpush1.bf16.xpose.msra.mxu0 0
        %1026 = vmatprep.subr.bf16.mxu0 0
        %1027 = vmatpush1.bf16.xpose.msra.mxu0 0
        %1028 = vmatprep.subr.bf16.mxu0 0
        %1029 = vmatpush1.bf16.xpose.msra.mxu0 0
        %1030 = vmatprep.subr.bf16.mxu0 0
        %1031 = vmatpush1.bf16.xpose.msra.mxu0 0
        %1032 = vmatprep.subr.bf16.mxu0 0
        %1033 = vmatpush1.bf16.xpose.msra.mxu0 0
        %1034 = vmatprep.subr.bf16.mxu0 0
        %1035 = vmatpush1.bf16.xpose.msra.mxu0 0
        %1036 = vmatprep.subr.bf16.mxu0 0
        %1037 = vmatpush1.bf16.xpose.msra.mxu0 0
        %1038 = vmatprep.subr.bf16.mxu0 0
        %1039 = vmatpush1.bf16.xpose.msra.mxu0 0
        %1040 = vmatprep.subr.bf16.mxu0 0
        %1041 = vmatpush1.bf16.xpose.msra.mxu0 0
        %1042 = vmatprep.mubr.bf16.mxu0 0
        %1043 = vmatmul.mubr.bf16.gmra.mrb[0].mxu0 %v1005
        %v1044 = vpop.f32.mrb[0].mxu0
        %v1045 = vadd.f32 0.0, %v1044
        %v1046 = vpop.f32.mrb[0].mxu0
        %v1047 = vpop.f32.mrb[0].mxu0
        %v1048 = vpop.f32.mrb[0].mxu0
        %1049 = vdwg.mxu0
        %v1050 = vsel %vm809, %v1045, -inf
        %1051 = vmax.xlane.f32.xlu0 %v1050
        %v1052 = vpop.xlane.xlu0 %1051
        %v1053 = vsub.f32 %v1045, %v1052
        %v1054 = vmul.f32 %v1053, 1.442695
        %v1055 = vpow.pop %v1054
        %v1056 = vsel %vm809, %v1055, 0.0
        %1057 = vadd.xlane.f32.xlu0 %v1056
        %v1058 = vpop.xlane.xlu0 %1057
        %v1059 = vpack.c.bf16 %v1055, %v1055
        %1061 = vrot.lane.b32.xlu0 %v995, 112
        %v1062 = vpop.permute.xlu0 %1061
        %v1065 = vsel %vm809, %v1059, 0
        %1067 = vmatprep.subr.bf16.mxu0 0
        %1068 = vmatpush1.bf16.msra.mxu0 %v1062
        %1069 = vmatprep.subr.bf16.mxu0 0
        %1070 = vmatpush1.bf16.msra.mxu0 0
        %1071 = vmatprep.subr.bf16.mxu0 0
        %1072 = vmatpush1.bf16.msra.mxu0 0
        %1073 = vmatprep.subr.bf16.mxu0 0
        %1074 = vmatpush1.bf16.msra.mxu0 0
        %1075 = vmatprep.subr.bf16.mxu0 0
        %1076 = vmatpush1.bf16.msra.mxu0 0
        %1077 = vmatprep.subr.bf16.mxu0 0
        %1078 = vmatpush1.bf16.msra.mxu0 0
        %1079 = vmatprep.subr.bf16.mxu0 0
        %1080 = vmatpush1.bf16.msra.mxu0 0
        %1081 = vmatprep.subr.bf16.mxu0 0
        %1082 = vmatpush1.bf16.msra.mxu0 0
        %1083 = vmatprep.subr.bf16.mxu0 0
        %1084 = vmatpush1.bf16.msra.mxu0 0
        %1085 = vmatprep.subr.bf16.mxu0 0
        %1086 = vmatpush1.bf16.msra.mxu0 0
        %1087 = vmatprep.subr.bf16.mxu0 0
        %1088 = vmatpush1.bf16.msra.mxu0 0
        %1089 = vmatprep.subr.bf16.mxu0 0
        %1090 = vmatpush1.bf16.msra.mxu0 0
        %1091 = vmatprep.subr.bf16.mxu0 0
        %1092 = vmatpush1.bf16.msra.mxu0 0
        %1093 = vmatprep.subr.bf16.mxu0 0
        %1094 = vmatpush1.bf16.msra.mxu0 0
        %1095 = vmatprep.subr.bf16.mxu0 0
        %1096 = vmatpush1.bf16.msra.mxu0 0
        %1097 = vmatprep.subr.bf16.mxu0 0
        %1098 = vmatpush1.bf16.msra.mxu0 0
        %1099 = vmatprep.mubr.bf16.mxu0 0
        %1100 = vmatmul.mubr.bf16.gmra.mrb[0].mxu0 %v1065
        %v1101 = vpop.f32.mrb[0].mxu0
        %v1102 = vadd.f32 0.0, %v1101
        %v1103 = vpop.f32.mrb[0].mxu0
        %v1104 = vpop.f32.mrb[0].mxu0
        %v1105 = vpop.f32.mrb[0].mxu0
        %1106 = vdwg.mxu0
        %v1107 = vrcp.pop %v1058
        %v1108 = vmul.f32 %v1102, %v1107
        %v1109 = vpack.c.bf16 %v1108, %v1108
        %v1111 = vunpack.c.l.b16 %v1109
        %v1112 = vpack.c.b16 %v1111, %v1111
        %1113 = vrot.lane.b32.xlu0 %v1112, 16
        %v1114 = vpop.permute.xlu0 %1113
        %vm1116 = vcmask 191616
        %1117 = vst.msk [vmem:[#allocation5] sm:$0xf] %vm1116, %v1114
        %v1118 = vld [vmem:[#allocation2] sm:$0xf]
        %v1119 = vld [vmem:[#allocation3] sm:$0xff]
        %v1120 = vld [vmem:[#allocation4] sm:$0xff]
        %v1122 = vunpack.c.l.b16 %v1118
        %v1123 = vpack.c.b16 %v1122, %v1122
        %1124 = vrot.lane.b32.xlu0 %v1123, 104
        %v1125 = vpop.permute.xlu0 %1124
        %1127 = vrot.lane.b32.xlu0 %v1119, 104
        %v1128 = vpop.permute.xlu0 %1127
        %v1130 = vsel %vm762, %v1125, 0
        %v1133 = vsel %vm762, %v1128, 0
        %1135 = vmatprep.subr.bf16.mxu0 0
        %1136 = vmatpush1.bf16.xpose.msra.mxu0 %v1133
        %1137 = vmatprep.subr.bf16.mxu0 0
        %1138 = vmatpush1.bf16.xpose.msra.mxu0 0
        %1139 = vmatprep.subr.bf16.mxu0 0
        %1140 = vmatpush1.bf16.xpose.msra.mxu0 0
        %1141 = vmatprep.subr.bf16.mxu0 0
        %1142 = vmatpush1.bf16.xpose.msra.mxu0 0
        %1143 = vmatprep.subr.bf16.mxu0 0
        %1144 = vmatpush1.bf16.xpose.msra.mxu0 0
        %1145 = vmatprep.subr.bf16.mxu0 0
        %1146 = vmatpush1.bf16.xpose.msra.mxu0 0
        %1147 = vmatprep.subr.bf16.mxu0 0
        %1148 = vmatpush1.bf16.xpose.msra.mxu0 0
        %1149 = vmatprep.subr.bf16.mxu0 0
        %1150 = vmatpush1.bf16.xpose.msra.mxu0 0
        %1151 = vmatprep.subr.bf16.mxu0 0
        %1152 = vmatpush1.bf16.xpose.msra.mxu0 0
        %1153 = vmatprep.subr.bf16.mxu0 0
        %1154 = vmatpush1.bf16.xpose.msra.mxu0 0
        %1155 = vmatprep.subr.bf16.mxu0 0
        %1156 = vmatpush1.bf16.xpose.msra.mxu0 0
        %1157 = vmatprep.subr.bf16.mxu0 0
        %1158 = vmatpush1.bf16.xpose.msra.mxu0 0
        %1159 = vmatprep.subr.bf16.mxu0 0
        %1160 = vmatpush1.bf16.xpose.msra.mxu0 0
        %1161 = vmatprep.subr.bf16.mxu0 0
        %1162 = vmatpush1.bf16.xpose.msra.mxu0 0
        %1163 = vmatprep.subr.bf16.mxu0 0
        %1164 = vmatpush1.bf16.xpose.msra.mxu0 0
        %1165 = vmatprep.subr.bf16.mxu0 0
        %1166 = vmatpush1.bf16.xpose.msra.mxu0 0
        %1167 = vmatprep.mubr.bf16.mxu0 0
        %1168 = vmatmul.mubr.bf16.gmra.mrb[0].mxu0 %v1130
        %v1169 = vpop.f32.mrb[0].mxu0
        %v1170 = vadd.f32 0.0, %v1169
        %v1171 = vpop.f32.mrb[0].mxu0
        %v1172 = vpop.f32.mrb[0].mxu0
        %v1173 = vpop.f32.mrb[0].mxu0
        %1174 = vdwg.mxu0
        %v1175 = vsel %vm809, %v1170, -inf
        %1176 = vmax.xlane.f32.xlu0 %v1175
        %v1177 = vpop.xlane.xlu0 %1176
        %v1178 = vsub.f32 %v1170, %v1177
        %v1179 = vmul.f32 %v1178, 1.442695
        %v1180 = vpow.pop %v1179
        %v1181 = vsel %vm809, %v1180, 0.0
        %1182 = vadd.xlane.f32.xlu0 %v1181
        %v1183 = vpop.xlane.xlu0 %1182
        %v1184 = vpack.c.bf16 %v1180, %v1180
        %1186 = vrot.lane.b32.xlu0 %v1120, 104
        %v1187 = vpop.permute.xlu0 %1186
        %v1190 = vsel %vm809, %v1184, 0
        %1192 = vmatprep.subr.bf16.mxu0 0
        %1193 = vmatpush1.bf16.msra.mxu0 %v1187
        %1194 = vmatprep.subr.bf16.mxu0 0
        %1195 = vmatpush1.bf16.msra.mxu0 0
        %1196 = vmatprep.subr.bf16.mxu0 0
        %1197 = vmatpush1.bf16.msra.mxu0 0
        %1198 = vmatprep.subr.bf16.mxu0 0
        %1199 = vmatpush1.bf16.msra.mxu0 0
        %1200 = vmatprep.subr.bf16.mxu0 0
        %1201 = vmatpush1.bf16.msra.mxu0 0
        %1202 = vmatprep.subr.bf16.mxu0 0
        %1203 = vmatpush1.bf16.msra.mxu0 0
        %1204 = vmatprep.subr.bf16.mxu0 0
        %1205 = vmatpush1.bf16.msra.mxu0 0
        %1206 = vmatprep.subr.bf16.mxu0 0
        %1207 = vmatpush1.bf16.msra.mxu0 0
        %1208 = vmatprep.subr.bf16.mxu0 0
        %1209 = vmatpush1.bf16.msra.mxu0 0
        %1210 = vmatprep.subr.bf16.mxu0 0
        %1211 = vmatpush1.bf16.msra.mxu0 0
        %1212 = vmatprep.subr.bf16.mxu0 0
        %1213 = vmatpush1.bf16.msra.mxu0 0
        %1214 = vmatprep.subr.bf16.mxu0 0
        %1215 = vmatpush1.bf16.msra.mxu0 0
        %1216 = vmatprep.subr.bf16.mxu0 0
        %1217 = vmatpush1.bf16.msra.mxu0 0
        %1218 = vmatprep.subr.bf16.mxu0 0
        %1219 = vmatpush1.bf16.msra.mxu0 0
        %1220 = vmatprep.subr.bf16.mxu0 0
        %1221 = vmatpush1.bf16.msra.mxu0 0
        %1222 = vmatprep.subr.bf16.mxu0 0
        %1223 = vmatpush1.bf16.msra.mxu0 0
        %1224 = vmatprep.mubr.bf16.mxu0 0
        %1225 = vmatmul.mubr.bf16.gmra.mrb[0].mxu0 %v1190
        %v1226 = vpop.f32.mrb[0].mxu0
        %v1227 = vadd.f32 0.0, %v1226
        %v1228 = vpop.f32.mrb[0].mxu0
        %v1229 = vpop.f32.mrb[0].mxu0
        %v1230 = vpop.f32.mrb[0].mxu0
        %1231 = vdwg.mxu0
        %v1232 = vrcp.pop %v1183
        %v1233 = vmul.f32 %v1227, %v1232
        %v1234 = vpack.c.bf16 %v1233, %v1233
        %v1236 = vunpack.c.l.b16 %v1234
        %v1237 = vpack.c.b16 %v1236, %v1236
        %1238 = vrot.lane.b32.xlu0 %v1237, 24
        %v1239 = vpop.permute.xlu0 %1238
        %vm1241 = vcmask 257216
        %1242 = vst.msk [vmem:[#allocation5] sm:$0xf] %vm1241, %v1239
        %v1243 = vld [vmem:[#allocation5] sm:$0xf]
        %v1244 = vld [vmem:[%s5] sm:$0xf]
        %v1245 = vld [vmem:[%s5 + $0x4] sm:$0xf]
        %v1246 = vld [vmem:[%s5 + $0x8] sm:$0xf]
        %v1247 = vld [vmem:[%s5 + $0xc] sm:$0xf]
        %v1248 = vld [vmem:[%s9] sm:$0x1]
        %v1250 = vlaneseq
        %v1251 = vshrl.u32 %v1250, 7
        %v1252 = vsub.s32 0, %v1251
        %v1253 = vrot.slane %v1248, %v1252
        %v1259 = vunpack.c.l.b16 %v1244
        %v1260 = vunpack.c.l.b16 %v1245
        %v1261 = vunpack.c.l.b16 %v1246
        %v1262 = vunpack.c.l.b16 %v1247
        %v1263 = vpack.c.b16 %v1260, %v1259
        %v1264 = vpack.c.b16 %v1262, %v1261
        %v1266 = vsel %vm662, %v1243, 0
        %v1269 = vsel %vm662, %v1263, 0
        %v1272 = vsel %vm662, %v1264, 0
        %1274 = vmatprep.subr.bf16.mxu0 0
        %1275 = vmatpush1.bf16.xpose.msra.mxu0 %v1269
        %1276 = vmatprep.subr.bf16.mxu0 0
        %1277 = vmatpush1.bf16.xpose.msra.mxu0 %v1272
        %1278 = vmatprep.subr.bf16.mxu0 0
        %1279 = vmatpush1.bf16.xpose.msra.mxu0 0
        %1280 = vmatprep.subr.bf16.mxu0 0
        %1281 = vmatpush1.bf16.xpose.msra.mxu0 0
        %1282 = vmatprep.subr.bf16.mxu0 0
        %1283 = vmatpush1.bf16.xpose.msra.mxu0 0
        %1284 = vmatprep.subr.bf16.mxu0 0
        %1285 = vmatpush1.bf16.xpose.msra.mxu0 0
        %1286 = vmatprep.subr.bf16.mxu0 0
        %1287 = vmatpush1.bf16.xpose.msra.mxu0 0
        %1288 = vmatprep.subr.bf16.mxu0 0
        %1289 = vmatpush1.bf16.xpose.msra.mxu0 0
        %1290 = vmatprep.subr.bf16.mxu0 0
        %1291 = vmatpush1.bf16.xpose.msra.mxu0 0
        %1292 = vmatprep.subr.bf16.mxu0 0
        %1293 = vmatpush1.bf16.xpose.msra.mxu0 0
        %1294 = vmatprep.subr.bf16.mxu0 0
        %1295 = vmatpush1.bf16.xpose.msra.mxu0 0
        %1296 = vmatprep.subr.bf16.mxu0 0
        %1297 = vmatpush1.bf16.xpose.msra.mxu0 0
        %1298 = vmatprep.subr.bf16.mxu0 0
        %1299 = vmatpush1.bf16.xpose.msra.mxu0 0
        %1300 = vmatprep.subr.bf16.mxu0 0
        %1301 = vmatpush1.bf16.xpose.msra.mxu0 0
        %1302 = vmatprep.subr.bf16.mxu0 0
        %1303 = vmatpush1.bf16.xpose.msra.mxu0 0
        %1304 = vmatprep.subr.bf16.mxu0 0
        %1305 = vmatpush1.bf16.xpose.msra.mxu0 0
        %1306 = vmatprep.mubr.bf16.mxu0 0
        %1307 = vmatmul.mubr.bf16.gmra.mrb[0].mxu0 %v1266
        %v1308 = vpop.f32.mrb[0].mxu0
        %v1309 = vadd.f32 %v1253, %v1308
        %v1310 = vpop.f32.mrb[0].mxu0
        %v1311 = vpop.f32.mrb[0].mxu0
        %v1312 = vpop.f32.mrb[0].mxu0
        %1313 = vdwg.mxu0
        %1314 = vst.msk [vmem:[%s501] sm:$0xff] %vm662, %v1309
        %s1315 = sand.u32 %s297, 1
        %s1316 = scalar_lea.sflag [#allocation8], %s1315
        %s1317 = sand.u32 %s297, 1
        %s1318 = smul.addr %s1317, 8
        %s1319 = scalar_lea.vmem [#allocation15], %s1318
        // Predicated region
        $region89: #{tpu_custom_call.1} parent=63 // pred_check
          %p1320 = pneg %p307
        $region90: #{tpu_custom_call.1} parent=63 // pred_check_branch
          %1322 = sbr.rel (%p1320) target = $region92
        $region91: #{tpu_custom_call.1} parent=63 // pred_region
          %s1324 = ssub.s32 128, 128
          %1325 = vsyncadd %s1316, %s1324
          %s1326 = sadd.s32 %s37, %s36
          %s1327 = smul.addr %s1326, 128
          %s1328 = scalar_lea.hbm %s11, %s1327
          %s1330 = sshll.u32 %s1319, 4
          %s1331 = int_to_ptr.vmem [resolvable:$true] %s1330
          %1333 = dma.vmem_to_hbm [thread:$0]  %s1331, 128, %s1328, %s1316
        $region92: #{tpu_custom_call.1} parent=63 // pred_fallthru
          _
      $region64: #{tpu_custom_call.1} parent=5 // pred_fallthru
        _
      %p1334 = scmp.le.s32.totalorder 2, %s27
      // Predicated region
      $region93: #{tpu_custom_call.1} parent=5 // pred_check
        %p1335 = pneg %p1334
      $region94: #{tpu_custom_call.1} parent=5 // pred_check_branch
        %1337 = sbr.rel (%p1335) target = $region96
      $region95: #{tpu_custom_call.1} parent=5 // pred_region
        %s1338 = ssub.s32 %s27, 2
        // Predicated region
        $region97: #{tpu_custom_call.1} parent=95 // pred_check
          %p1339 = pneg %p313
        $region98: #{tpu_custom_call.1} parent=95 // pred_check_branch
          %1341 = sbr.rel (%p1339) target = $region100
        $region99: #{tpu_custom_call.1} parent=95 // pred_region
          %s1342 = sand.u32 %s298, 1
          %s1343 = scalar_lea.sflag [#allocation8], %s1342
          %s1344 = sand.u32 %s298, 1
          %s1345 = smul.addr %s1344, 8
          %s1346 = scalar_lea.vmem [#allocation15], %s1345
          %1347 = dma.done %s1343, 128
        $region100: #{tpu_custom_call.1} parent=95 // pred_fallthru
          _
      $region96: #{tpu_custom_call.1} parent=5 // pred_fallthru
        _
    $region6: #{tpu_custom_call.1} parent=1 // loop_footer
      %s31 = sadd.s32 1, %s27
    $region7: #{tpu_custom_call.1} parent=1 // loop_footer_branch
      %26 = sbr.rel target = $region3
    $region8: #{tpu_custom_call.1} parent=1 // loop_exit
      _
    %1348 = vsyncpa [#allocation7], 1
    %s1349 = scalar_lea.sflag [#allocation7], 1
    %1350 = vsyncpa %s1349, 1
    %1351 = vsyncpa [#allocation10], 1
    %s1352 = scalar_lea.sflag [#allocation10], 1
    %1353 = vsyncpa %s1352, 1
    %1354 = vsyncpa [#allocation13], 1
    %1355 = vsyncpa [#allocation8], 1
    %s1356 = scalar_lea.sflag [#allocation8], 1
    %1357 = vsyncpa %s1356, 1

</llo_original>
